<compile_context>
chip_gen: v7x
topology: tpu7x:2x2x1
jax: 0.10.0
libtpu: 0.0.40
codegen_flags: <defaults>
</compile_context>

<pallas_src>
import functools
import math

import jax
import jax.numpy as jnp
from jax import lax
from jax.experimental import pallas as pl
from jax.experimental.pallas import tpu as pltpu


def _csa_kernel(x_ref, w_in_ref, b_in_ref, w_qkv_ref, b_qkv_ref,
                wo_ref, bo_ref, gamma_ref, beta_ref, out_ref, o_scratch,
                *, nhead, eps, block_b, seq_len):
    d_model = w_in_ref.shape[1]
    hd = d_model // nhead
    rows = block_b * seq_len                         # rows in this slab

    # bf16 MXU operands, f32 accumulation.
    x_bf = x_ref[...].astype(jnp.bfloat16)           # (rows, input_dim)

    # fc_in: one big-M matmul over the whole batch block.
    h = jnp.dot(x_bf, w_in_ref[...], preferred_element_type=jnp.float32) + b_in_ref[...]
    h_bf = h.astype(jnp.bfloat16)

    # Fused Q|K|V projection (single lane-dense N = 3*d_model matmul).
    # The 1/sqrt(hd) attention scale is pre-folded into the Q columns of
    # w_qkv / b_qkv in the wrapper, so no score scaling is needed here.
    qkv = jnp.dot(h_bf, w_qkv_ref[...], preferred_element_type=jnp.float32) + b_qkv_ref[...]

    # Per-head attention, batched over the batch group (batch dim = block_b).
    # TODO(synk): for large nhead collapse this static unroll into a single
    # batched dot_general / fori_loop(unroll=True) to bound live ranges.
    for hi in range(nhead):
        q = qkv[:, hi * hd:(hi + 1) * hd] \
            .reshape(block_b, seq_len, hd).astype(jnp.bfloat16)
        k = qkv[:, d_model + hi * hd:d_model + (hi + 1) * hd] \
            .reshape(block_b, seq_len, hd).astype(jnp.bfloat16)
        v = qkv[:, 2 * d_model + hi * hd:2 * d_model + (hi + 1) * hd] \
            .reshape(block_b, seq_len, hd).astype(jnp.bfloat16)

        # scores: contract on head_dim, batch over block_b -- no explicit k.T.
        s = lax.dot_general(q, k, (((2,), (2,)), ((0,), (0,))),
                            preferred_element_type=jnp.float32)        # (block_b, T, T)
        s = s - jnp.max(s, axis=-1, keepdims=True)
        p = jnp.exp(s)                                                  # unnormalized probs
        inv_denom = pl.reciprocal(jnp.sum(p, axis=-1, keepdims=True), approx=True)  # EUP

        # attn @ V, batched over block_b; softmax normalization deferred to the
        # (.., hd)-wide output instead of the (.., T)-wide probability matrix.
        o = lax.dot_general(p.astype(jnp.bfloat16), v, (((2,), (1,)), ((0,), (0,))),
                            preferred_element_type=jnp.float32)        # (block_b, T, hd)
        o = o * inv_denom

        # Merge heads by writing into the scratch at a static lane offset.
        o_scratch[:, hi * hd:(hi + 1) * hd] = o.reshape(rows, hd)

    # One K = d_model output-projection matmul over the merged heads.
    attn = jnp.dot(o_scratch[...].astype(jnp.bfloat16), wo_ref[...],
                   preferred_element_type=jnp.float32)                 # (rows, d_model)

    # residual (dropout = identity in eval mode) + LayerNorm over d_model (f32).
    # TODO(synk): training-mode RNG dropout (p=0.3) intentionally omitted (eval semantics).
    y = h + attn + bo_ref[...]
    mean = jnp.mean(y, axis=-1, keepdims=True)
    var = jnp.mean((y - mean) ** 2, axis=-1, keepdims=True)
    yn = (y - mean) * lax.rsqrt(var + eps)
    out_ref[...] = yn * gamma_ref[...] + beta_ref[...]                 # one slab store


def _pick_block_b(B, T, target_rows):
    """Largest batch group whose rows fit target_rows, satisfies the (8,*) rule,
    and (when possible) leaves >= 2 grid steps so v7x's 2 TCs both get work."""
    divisors = [c for c in range(1, B + 1) if B % c == 0]
    valid = [c for c in divisors if (c * T) % 8 == 0 or c == B]
    if not valid:
        valid = [B]                                   # full slab always legal
    multi = [c for c in valid if B // c >= 2]
    pool = multi if multi else valid
    fitting = [c for c in pool if c * T <= target_rows]
    return max(fitting) if fitting else min(pool)


def cross_sensor_attention(x, params, *, nhead=4, eps=1e-5, block_b=None,
                           target_rows=None, vmem_limit_bytes=None, training=False):
    """x: (B, T, input_dim) float32 -> (B, T, d_model) float32 (eval semantics)."""
    assert not training, "kernel implements eval-mode semantics (dropout = identity)"
    B, T, input_dim = x.shape
    d_model = params["w_in"].shape[0]
    assert d_model % nhead == 0
    hd = d_model // nhead

    if target_rows is None:
        try:
            kind = jax.devices()[0].device_kind.lower()
        except Exception:
            kind = ""
        # v5e: tight scoped VMEM, MXU saturates at 128 rows.
        # v6e/v7x: 256-wide MXU; bigger row blocks amortize per-step overhead.
        target_rows = 256 if "v5" in kind else 512

    if block_b is None:
        block_b = _pick_block_b(B, T, target_rows)
    assert B % block_b == 0
    rows = block_b * T
    assert rows % 8 == 0 or block_b == B, "row block violates the (8,128) sublane rule"
    grid_b = B // block_b

    # ---- parameter prep (plain JAX glue, outside the kernel) ----
    # bf16 matmul operands (MXU-native); biases / LayerNorm params stay f32.
    scale = 1.0 / math.sqrt(hd)
    col_scale = jnp.concatenate(
        [jnp.full((d_model,), scale, jnp.float32),
         jnp.ones((2 * d_model,), jnp.float32)])                   # scale only Q columns
    w_in_t = params["w_in"].T.astype(jnp.bfloat16)                  # (input_dim, d_model)
    b_in = params["b_in"].reshape(1, d_model).astype(jnp.float32)
    w_qkv_t = (params["in_proj_w"].T * col_scale).astype(jnp.bfloat16)   # (d_model, 3*d_model)
    b_qkv = (params["in_proj_b"] * col_scale).reshape(1, 3 * d_model).astype(jnp.float32)
    wo_t = params["out_proj_w"].T.astype(jnp.bfloat16)              # (d_model, d_model)
    bo = params["out_proj_b"].reshape(1, d_model).astype(jnp.float32)
    gamma = params["ln_w"].reshape(1, d_model).astype(jnp.float32)
    beta = params["ln_b"].reshape(1, d_model).astype(jnp.float32)

    # Present x / out as lane-dense 2-D slabs: (B*T, feature).
    x2 = x.reshape(B * T, input_dim)

    if vmem_limit_bytes is None:
        f32b, bf16b = 4, 2
        est = (2 * rows * (input_dim + d_model) * f32b                       # pipelined x/out
               + (input_dim * d_model + 3 * d_model * d_model
                  + d_model * d_model) * bf16b                               # bf16 weights
               + 8 * d_model * f32b                                          # biases / LN
               + rows * (d_model + 3 * d_model + 2 * d_model) * f32b         # h, qkv, y, scratch
               + 2 * block_b * T * T * f32b)                                 # s / p (one head)
        vmem_limit_bytes = min(96 << 20, max(32 << 20, 2 * est))

    full2 = lambda arr: pl.BlockSpec(arr.shape, lambda b: (0, 0))

    kernel = functools.partial(_csa_kernel, nhead=nhead, eps=eps,
                               block_b=block_b, seq_len=T)
    out2 = pl.pallas_call(
        kernel,
        out_shape=jax.ShapeDtypeStruct((B * T, d_model), jnp.float32),
        grid_spec=pltpu.PrefetchScalarGridSpec(
            num_scalar_prefetch=0,
            grid=(grid_b,),
            in_specs=[
                pl.BlockSpec((rows, input_dim), lambda b: (b, 0)),   # x slab
                full2(w_in_t), full2(b_in),
                full2(w_qkv_t), full2(b_qkv),
                full2(wo_t), full2(bo),
                full2(gamma), full2(beta),
            ],
            out_specs=pl.BlockSpec((rows, d_model), lambda b: (b, 0)),
            scratch_shapes=[pltpu.VMEM((rows, d_model), jnp.float32)],   # merged-head buffer
        ),
        compiler_params=pltpu.CompilerParams(
            dimension_semantics=("parallel",),
            vmem_limit_bytes=int(vmem_limit_bytes)),
    )(x2, w_in_t, b_in, w_qkv_t, b_qkv, wo_t, bo, gamma, beta)
    return out2.reshape(B, T, d_model)


def reference(x, params, *, nhead=4, eps=1e-5):
    """Pure-JAX f32 reference matching the PyTorch forward (eval mode)."""
    h = x @ params["w_in"].T + params["b_in"]
    wq, wk, wv = jnp.split(params["in_proj_w"], 3, axis=0)
    bq, bk, bv = jnp.split(params["in_proj_b"], 3)
    q = h @ wq.T + bq
    k = h @ wk.T + bk
    v = h @ wv.T + bv
    B, T, d = h.shape
    hd = d // nhead
    qh = q.reshape(B, T, nhead, hd).transpose(0, 2, 1, 3)
    kh = k.reshape(B, T, nhead, hd).transpose(0, 2, 1, 3)
    vh = v.reshape(B, T, nhead, hd).transpose(0, 2, 1, 3)
    s = jnp.einsum("bhtd,bhsd->bhts", qh, kh) / jnp.sqrt(jnp.float32(hd))
    a = jax.nn.softmax(s, axis=-1)
    o = jnp.einsum("bhts,bhsd->bhtd", a, vh).transpose(0, 2, 1, 3).reshape(B, T, d)
    attn_out = o @ params["out_proj_w"].T + params["out_proj_b"]
    y = h + attn_out
    mean = y.mean(-1, keepdims=True)
    var = ((y - mean) ** 2).mean(-1, keepdims=True)
    yn = (y - mean) / jnp.sqrt(var + eps)
    return yn * params["ln_w"] + params["ln_b"]


if __name__ == "__main__":
    # Small shapes consistent with the module's forward: x (B, T, input_dim)
    B, T, input_dim = 2, 8, 16
    d_model, nhead = 32, 4

    key = jax.random.PRNGKey(0)
    keys = jax.random.split(key, 8)
    params = {
        "w_in":        0.1 * jax.random.normal(keys[0], (d_model, input_dim), jnp.float32),
        "b_in":        0.1 * jax.random.normal(keys[1], (d_model,), jnp.float32),
        "in_proj_w":   0.1 * jax.random.normal(keys[2], (3 * d_model, d_model), jnp.float32),
        "in_proj_b":   0.1 * jax.random.normal(keys[3], (3 * d_model,), jnp.float32),
        "out_proj_w":  0.1 * jax.random.normal(keys[4], (d_model, d_model), jnp.float32),
        "out_proj_b":  0.1 * jax.random.normal(keys[5], (d_model,), jnp.float32),
        "ln_w":        jnp.ones((d_model,), jnp.float32),
        "ln_b":        jnp.zeros((d_model,), jnp.float32),
    }
    x = jax.random.normal(keys[6], (B, T, input_dim), jnp.float32)

    out = cross_sensor_attention(x, params, nhead=nhead)
    out = jax.block_until_ready(out)

    ref = reference(x, params, nhead=nhead)
    assert out.shape == (B, T, d_model)
    err = float(jnp.max(jnp.abs(out - ref)))
    # Tolerance relaxed vs f32-exact: bf16 MXU operands (f32 accumulation) plus
    # the EUP approximate reciprocal in the softmax denominator.
    assert jnp.allclose(out, ref, atol=5e-2, rtol=5e-2), err

    print("KERNEL_OK")
</pallas_src>

<mosaic_0001>
module attributes {stable_mosaic.version = 11 : i64} {
  func.func @_csa_kernel(%arg0: i32, %arg1: memref<8x16xf32, #tpu.memory_space<vmem>>, %arg2: memref<16x32xbf16, #tpu.memory_space<vmem>>, %arg3: memref<1x32xf32, #tpu.memory_space<vmem>>, %arg4: memref<32x96xbf16, #tpu.memory_space<vmem>>, %arg5: memref<1x96xf32, #tpu.memory_space<vmem>>, %arg6: memref<32x32xbf16, #tpu.memory_space<vmem>>, %arg7: memref<1x32xf32, #tpu.memory_space<vmem>>, %arg8: memref<1x32xf32, #tpu.memory_space<vmem>>, %arg9: memref<1x32xf32, #tpu.memory_space<vmem>>, %arg10: memref<8x32xf32, #tpu.memory_space<vmem>>, %arg11: memref<8x32xf32, #tpu.memory_space<vmem>>) attributes {dimension_semantics = [#tpu.dimension_semantics<parallel>], iteration_bounds = array<i64: 2>, scalar_prefetch = 0 : i64, scratch_operands = 1 : i64, tpu.core_type = #tpu.core_type<tc>, window_params = [{transform_indices = @transform_0, window_bounds = array<i64: 8, 16>}, {pipeline_mode = #tpu.pipeline_mode<synchronous>, transform_indices = @transform_1, window_bounds = array<i64: 16, 32>}, {pipeline_mode = #tpu.pipeline_mode<synchronous>, transform_indices = @transform_2, window_bounds = array<i64: 1, 32>}, {pipeline_mode = #tpu.pipeline_mode<synchronous>, transform_indices = @transform_3, window_bounds = array<i64: 32, 96>}, {pipeline_mode = #tpu.pipeline_mode<synchronous>, transform_indices = @transform_4, window_bounds = array<i64: 1, 96>}, {pipeline_mode = #tpu.pipeline_mode<synchronous>, transform_indices = @transform_5, window_bounds = array<i64: 32, 32>}, {pipeline_mode = #tpu.pipeline_mode<synchronous>, transform_indices = @transform_6, window_bounds = array<i64: 1, 32>}, {pipeline_mode = #tpu.pipeline_mode<synchronous>, transform_indices = @transform_7, window_bounds = array<i64: 1, 32>}, {pipeline_mode = #tpu.pipeline_mode<synchronous>, transform_indices = @transform_8, window_bounds = array<i64: 1, 32>}, {transform_indices = @transform_9, window_bounds = array<i64: 8, 32>}]} {
    %c0 = arith.constant 0 : index
    %c0_0 = arith.constant 0 : index
    %0 = vector.load %arg1[%c0, %c0_0] : memref<8x16xf32, #tpu.memory_space<vmem>>, vector<8x16xf32>
    %1 = arith.truncf %0 : vector<8x16xf32> to vector<8x16xbf16>
    %c0_1 = arith.constant 0 : index
    %c0_2 = arith.constant 0 : index
    %2 = vector.load %arg2[%c0_1, %c0_2] : memref<16x32xbf16, #tpu.memory_space<vmem>>, vector<16x32xbf16>
    %cst = arith.constant dense<0.000000e+00> : vector<8x32xf32>
    %3 = tpu.matmul %1, %2, %cst {dimension_numbers = #tpu.dot_dimension_numbers<[1], [0], [0], [1], [0, 0, 1, 1], [], []>} : vector<8x16xbf16>, vector<16x32xbf16>, vector<8x32xf32> -> vector<8x32xf32>
    %c0_3 = arith.constant 0 : index
    %c0_4 = arith.constant 0 : index
    %4 = vector.load %arg3[%c0_3, %c0_4] : memref<1x32xf32, #tpu.memory_space<vmem>>, vector<1x32xf32>
    %5 = vector.broadcast %4 : vector<1x32xf32> to vector<8x32xf32>
    %6 = arith.addf %3, %5 : vector<8x32xf32>
    %7 = arith.truncf %6 : vector<8x32xf32> to vector<8x32xbf16>
    %c0_5 = arith.constant 0 : index
    %c0_6 = arith.constant 0 : index
    %8 = vector.load %arg4[%c0_5, %c0_6] : memref<32x96xbf16, #tpu.memory_space<vmem>>, vector<32x96xbf16>
    %cst_7 = arith.constant dense<0.000000e+00> : vector<8x96xf32>
    %9 = tpu.matmul %7, %8, %cst_7 {dimension_numbers = #tpu.dot_dimension_numbers<[1], [0], [0], [1], [0, 0, 1, 1], [], []>} : vector<8x32xbf16>, vector<32x96xbf16>, vector<8x96xf32> -> vector<8x96xf32>
    %c0_8 = arith.constant 0 : index
    %c0_9 = arith.constant 0 : index
    %10 = vector.load %arg5[%c0_8, %c0_9] : memref<1x96xf32, #tpu.memory_space<vmem>>, vector<1x96xf32>
    %11 = vector.broadcast %10 : vector<1x96xf32> to vector<8x96xf32>
    %12 = arith.addf %9, %11 : vector<8x96xf32>
    %13 = vector.extract_strided_slice %12 {offsets = [0, 0], sizes = [8, 8], strides = [1, 1]} : vector<8x96xf32> to vector<8x8xf32>
    %14 = vector.shape_cast %13 : vector<8x8xf32> to vector<1x8x8xf32>
    %15 = arith.truncf %14 : vector<1x8x8xf32> to vector<1x8x8xbf16>
    %16 = vector.extract_strided_slice %12 {offsets = [0, 32], sizes = [8, 8], strides = [1, 1]} : vector<8x96xf32> to vector<8x8xf32>
    %17 = vector.shape_cast %16 : vector<8x8xf32> to vector<1x8x8xf32>
    %18 = arith.truncf %17 : vector<1x8x8xf32> to vector<1x8x8xbf16>
    %19 = vector.extract_strided_slice %12 {offsets = [0, 64], sizes = [8, 8], strides = [1, 1]} : vector<8x96xf32> to vector<8x8xf32>
    %20 = vector.shape_cast %19 : vector<8x8xf32> to vector<1x8x8xf32>
    %21 = arith.truncf %20 : vector<1x8x8xf32> to vector<1x8x8xbf16>
    %cst_10 = arith.constant dense<0.000000e+00> : vector<1x8x8xf32>
    %22 = tpu.matmul %15, %18, %cst_10 {dimension_numbers = #tpu.dot_dimension_numbers<[2], [2], [1], [1], [0, 0, 0, 1, 1, 1], [0], [0]>} : vector<1x8x8xbf16>, vector<1x8x8xbf16>, vector<1x8x8xf32> -> vector<1x8x8xf32>
    %cst_11 = arith.constant dense<0xFF800000> : vector<1x8xf32>
    %23 = vector.multi_reduction <maximumf>, %22, %cst_11 [2] : vector<1x8x8xf32> to vector<1x8xf32>
    %24 = vector.shape_cast %23 : vector<1x8xf32> to vector<1x8x1xf32>
    %25 = vector.broadcast %24 : vector<1x8x1xf32> to vector<1x8x8xf32>
    %26 = arith.subf %22, %25 : vector<1x8x8xf32>
    %27 = math.exp %26 : vector<1x8x8xf32>
    %cst_12 = arith.constant dense<0.000000e+00> : vector<1x8xf32>
    %28 = vector.multi_reduction <add>, %27, %cst_12 [2] : vector<1x8x8xf32> to vector<1x8xf32>
    %29 = vector.shape_cast %28 : vector<1x8xf32> to vector<1x8x1xf32>
    %30 = tpu.reciprocal %29 {approx = true} : vector<1x8x1xf32> -> vector<1x8x1xf32>
    %31 = arith.truncf %27 : vector<1x8x8xf32> to vector<1x8x8xbf16>
    %cst_13 = arith.constant dense<0.000000e+00> : vector<1x8x8xf32>
    %32 = tpu.matmul %31, %21, %cst_13 {dimension_numbers = #tpu.dot_dimension_numbers<[2], [1], [1], [2], [0, 0, 0, 1, 1, 2], [0], [0]>} : vector<1x8x8xbf16>, vector<1x8x8xbf16>, vector<1x8x8xf32> -> vector<1x8x8xf32>
    %33 = vector.broadcast %30 : vector<1x8x1xf32> to vector<1x8x8xf32>
    %34 = arith.mulf %32, %33 : vector<1x8x8xf32>
    %35 = vector.shape_cast %34 : vector<1x8x8xf32> to vector<8x8xf32>
    %c0_14 = arith.constant 0 : index
    %c0_15 = arith.constant 0 : index
    %36 = vector.load %arg11[%c0_14, %c0_15] : memref<8x32xf32, #tpu.memory_space<vmem>>, vector<8x8xf32>
    tpu.vector_store %arg11[%c0_14, %c0_15], %35 {strides = array<i32>} : memref<8x32xf32, #tpu.memory_space<vmem>>, vector<8x8xf32>,
    %37 = vector.extract_strided_slice %12 {offsets = [0, 8], sizes = [8, 8], strides = [1, 1]} : vector<8x96xf32> to vector<8x8xf32>
    %38 = vector.shape_cast %37 : vector<8x8xf32> to vector<1x8x8xf32>
    %39 = arith.truncf %38 : vector<1x8x8xf32> to vector<1x8x8xbf16>
    %40 = vector.extract_strided_slice %12 {offsets = [0, 40], sizes = [8, 8], strides = [1, 1]} : vector<8x96xf32> to vector<8x8xf32>
    %41 = vector.shape_cast %40 : vector<8x8xf32> to vector<1x8x8xf32>
    %42 = arith.truncf %41 : vector<1x8x8xf32> to vector<1x8x8xbf16>
    %43 = vector.extract_strided_slice %12 {offsets = [0, 72], sizes = [8, 8], strides = [1, 1]} : vector<8x96xf32> to vector<8x8xf32>
    %44 = vector.shape_cast %43 : vector<8x8xf32> to vector<1x8x8xf32>
    %45 = arith.truncf %44 : vector<1x8x8xf32> to vector<1x8x8xbf16>
    %cst_16 = arith.constant dense<0.000000e+00> : vector<1x8x8xf32>
    %46 = tpu.matmul %39, %42, %cst_16 {dimension_numbers = #tpu.dot_dimension_numbers<[2], [2], [1], [1], [0, 0, 0, 1, 1, 1], [0], [0]>} : vector<1x8x8xbf16>, vector<1x8x8xbf16>, vector<1x8x8xf32> -> vector<1x8x8xf32>
    %cst_17 = arith.constant dense<0xFF800000> : vector<1x8xf32>
    %47 = vector.multi_reduction <maximumf>, %46, %cst_17 [2] : vector<1x8x8xf32> to vector<1x8xf32>
    %48 = vector.shape_cast %47 : vector<1x8xf32> to vector<1x8x1xf32>
    %49 = vector.broadcast %48 : vector<1x8x1xf32> to vector<1x8x8xf32>
    %50 = arith.subf %46, %49 : vector<1x8x8xf32>
    %51 = math.exp %50 : vector<1x8x8xf32>
    %cst_18 = arith.constant dense<0.000000e+00> : vector<1x8xf32>
    %52 = vector.multi_reduction <add>, %51, %cst_18 [2] : vector<1x8x8xf32> to vector<1x8xf32>
    %53 = vector.shape_cast %52 : vector<1x8xf32> to vector<1x8x1xf32>
    %54 = tpu.reciprocal %53 {approx = true} : vector<1x8x1xf32> -> vector<1x8x1xf32>
    %55 = arith.truncf %51 : vector<1x8x8xf32> to vector<1x8x8xbf16>
    %cst_19 = arith.constant dense<0.000000e+00> : vector<1x8x8xf32>
    %56 = tpu.matmul %55, %45, %cst_19 {dimension_numbers = #tpu.dot_dimension_numbers<[2], [1], [1], [2], [0, 0, 0, 1, 1, 2], [0], [0]>} : vector<1x8x8xbf16>, vector<1x8x8xbf16>, vector<1x8x8xf32> -> vector<1x8x8xf32>
    %57 = vector.broadcast %54 : vector<1x8x1xf32> to vector<1x8x8xf32>
    %58 = arith.mulf %56, %57 : vector<1x8x8xf32>
    %59 = vector.shape_cast %58 : vector<1x8x8xf32> to vector<8x8xf32>
    %c0_20 = arith.constant 0 : index
    %c8 = arith.constant 8 : index
    %60 = vector.load %arg11[%c0_20, %c8] : memref<8x32xf32, #tpu.memory_space<vmem>>, vector<8x8xf32>
    tpu.vector_store %arg11[%c0_20, %c8], %59 {strides = array<i32>} : memref<8x32xf32, #tpu.memory_space<vmem>>, vector<8x8xf32>,
    %61 = vector.extract_strided_slice %12 {offsets = [0, 16], sizes = [8, 8], strides = [1, 1]} : vector<8x96xf32> to vector<8x8xf32>
    %62 = vector.shape_cast %61 : vector<8x8xf32> to vector<1x8x8xf32>
    %63 = arith.truncf %62 : vector<1x8x8xf32> to vector<1x8x8xbf16>
    %64 = vector.extract_strided_slice %12 {offsets = [0, 48], sizes = [8, 8], strides = [1, 1]} : vector<8x96xf32> to vector<8x8xf32>
    %65 = vector.shape_cast %64 : vector<8x8xf32> to vector<1x8x8xf32>
    %66 = arith.truncf %65 : vector<1x8x8xf32> to vector<1x8x8xbf16>
    %67 = vector.extract_strided_slice %12 {offsets = [0, 80], sizes = [8, 8], strides = [1, 1]} : vector<8x96xf32> to vector<8x8xf32>
    %68 = vector.shape_cast %67 : vector<8x8xf32> to vector<1x8x8xf32>
    %69 = arith.truncf %68 : vector<1x8x8xf32> to vector<1x8x8xbf16>
    %cst_21 = arith.constant dense<0.000000e+00> : vector<1x8x8xf32>
    %70 = tpu.matmul %63, %66, %cst_21 {dimension_numbers = #tpu.dot_dimension_numbers<[2], [2], [1], [1], [0, 0, 0, 1, 1, 1], [0], [0]>} : vector<1x8x8xbf16>, vector<1x8x8xbf16>, vector<1x8x8xf32> -> vector<1x8x8xf32>
    %cst_22 = arith.constant dense<0xFF800000> : vector<1x8xf32>
    %71 = vector.multi_reduction <maximumf>, %70, %cst_22 [2] : vector<1x8x8xf32> to vector<1x8xf32>
    %72 = vector.shape_cast %71 : vector<1x8xf32> to vector<1x8x1xf32>
    %73 = vector.broadcast %72 : vector<1x8x1xf32> to vector<1x8x8xf32>
    %74 = arith.subf %70, %73 : vector<1x8x8xf32>
    %75 = math.exp %74 : vector<1x8x8xf32>
    %cst_23 = arith.constant dense<0.000000e+00> : vector<1x8xf32>
    %76 = vector.multi_reduction <add>, %75, %cst_23 [2] : vector<1x8x8xf32> to vector<1x8xf32>
    %77 = vector.shape_cast %76 : vector<1x8xf32> to vector<1x8x1xf32>
    %78 = tpu.reciprocal %77 {approx = true} : vector<1x8x1xf32> -> vector<1x8x1xf32>
    %79 = arith.truncf %75 : vector<1x8x8xf32> to vector<1x8x8xbf16>
    %cst_24 = arith.constant dense<0.000000e+00> : vector<1x8x8xf32>
    %80 = tpu.matmul %79, %69, %cst_24 {dimension_numbers = #tpu.dot_dimension_numbers<[2], [1], [1], [2], [0, 0, 0, 1, 1, 2], [0], [0]>} : vector<1x8x8xbf16>, vector<1x8x8xbf16>, vector<1x8x8xf32> -> vector<1x8x8xf32>
    %81 = vector.broadcast %78 : vector<1x8x1xf32> to vector<1x8x8xf32>
    %82 = arith.mulf %80, %81 : vector<1x8x8xf32>
    %83 = vector.shape_cast %82 : vector<1x8x8xf32> to vector<8x8xf32>
    %c0_25 = arith.constant 0 : index
    %c16 = arith.constant 16 : index
    %84 = vector.load %arg11[%c0_25, %c16] : memref<8x32xf32, #tpu.memory_space<vmem>>, vector<8x8xf32>
    tpu.vector_store %arg11[%c0_25, %c16], %83 {strides = array<i32>} : memref<8x32xf32, #tpu.memory_space<vmem>>, vector<8x8xf32>,
    %85 = vector.extract_strided_slice %12 {offsets = [0, 24], sizes = [8, 8], strides = [1, 1]} : vector<8x96xf32> to vector<8x8xf32>
    %86 = vector.shape_cast %85 : vector<8x8xf32> to vector<1x8x8xf32>
    %87 = arith.truncf %86 : vector<1x8x8xf32> to vector<1x8x8xbf16>
    %88 = vector.extract_strided_slice %12 {offsets = [0, 56], sizes = [8, 8], strides = [1, 1]} : vector<8x96xf32> to vector<8x8xf32>
    %89 = vector.shape_cast %88 : vector<8x8xf32> to vector<1x8x8xf32>
    %90 = arith.truncf %89 : vector<1x8x8xf32> to vector<1x8x8xbf16>
    %91 = vector.extract_strided_slice %12 {offsets = [0, 88], sizes = [8, 8], strides = [1, 1]} : vector<8x96xf32> to vector<8x8xf32>
    %92 = vector.shape_cast %91 : vector<8x8xf32> to vector<1x8x8xf32>
    %93 = arith.truncf %92 : vector<1x8x8xf32> to vector<1x8x8xbf16>
    %cst_26 = arith.constant dense<0.000000e+00> : vector<1x8x8xf32>
    %94 = tpu.matmul %87, %90, %cst_26 {dimension_numbers = #tpu.dot_dimension_numbers<[2], [2], [1], [1], [0, 0, 0, 1, 1, 1], [0], [0]>} : vector<1x8x8xbf16>, vector<1x8x8xbf16>, vector<1x8x8xf32> -> vector<1x8x8xf32>
    %cst_27 = arith.constant dense<0xFF800000> : vector<1x8xf32>
    %95 = vector.multi_reduction <maximumf>, %94, %cst_27 [2] : vector<1x8x8xf32> to vector<1x8xf32>
    %96 = vector.shape_cast %95 : vector<1x8xf32> to vector<1x8x1xf32>
    %97 = vector.broadcast %96 : vector<1x8x1xf32> to vector<1x8x8xf32>
    %98 = arith.subf %94, %97 : vector<1x8x8xf32>
    %99 = math.exp %98 : vector<1x8x8xf32>
    %cst_28 = arith.constant dense<0.000000e+00> : vector<1x8xf32>
    %100 = vector.multi_reduction <add>, %99, %cst_28 [2] : vector<1x8x8xf32> to vector<1x8xf32>
    %101 = vector.shape_cast %100 : vector<1x8xf32> to vector<1x8x1xf32>
    %102 = tpu.reciprocal %101 {approx = true} : vector<1x8x1xf32> -> vector<1x8x1xf32>
    %103 = arith.truncf %99 : vector<1x8x8xf32> to vector<1x8x8xbf16>
    %cst_29 = arith.constant dense<0.000000e+00> : vector<1x8x8xf32>
    %104 = tpu.matmul %103, %93, %cst_29 {dimension_numbers = #tpu.dot_dimension_numbers<[2], [1], [1], [2], [0, 0, 0, 1, 1, 2], [0], [0]>} : vector<1x8x8xbf16>, vector<1x8x8xbf16>, vector<1x8x8xf32> -> vector<1x8x8xf32>
    %105 = vector.broadcast %102 : vector<1x8x1xf32> to vector<1x8x8xf32>
    %106 = arith.mulf %104, %105 : vector<1x8x8xf32>
    %107 = vector.shape_cast %106 : vector<1x8x8xf32> to vector<8x8xf32>
    %c0_30 = arith.constant 0 : index
    %c24 = arith.constant 24 : index
    %108 = vector.load %arg11[%c0_30, %c24] : memref<8x32xf32, #tpu.memory_space<vmem>>, vector<8x8xf32>
    tpu.vector_store %arg11[%c0_30, %c24], %107 {strides = array<i32>} : memref<8x32xf32, #tpu.memory_space<vmem>>, vector<8x8xf32>,
    %c0_31 = arith.constant 0 : index
    %c0_32 = arith.constant 0 : index
    %109 = vector.load %arg11[%c0_31, %c0_32] : memref<8x32xf32, #tpu.memory_space<vmem>>, vector<8x32xf32>
    %110 = arith.truncf %109 : vector<8x32xf32> to vector<8x32xbf16>
    %c0_33 = arith.constant 0 : index
    %c0_34 = arith.constant 0 : index
    %111 = vector.load %arg6[%c0_33, %c0_34] : memref<32x32xbf16, #tpu.memory_space<vmem>>, vector<32x32xbf16>
    %cst_35 = arith.constant dense<0.000000e+00> : vector<8x32xf32>
    %112 = tpu.matmul %110, %111, %cst_35 {dimension_numbers = #tpu.dot_dimension_numbers<[1], [0], [0], [1], [0, 0, 1, 1], [], []>} : vector<8x32xbf16>, vector<32x32xbf16>, vector<8x32xf32> -> vector<8x32xf32>
    %113 = arith.addf %6, %112 : vector<8x32xf32>
    %c0_36 = arith.constant 0 : index
    %c0_37 = arith.constant 0 : index
    %114 = vector.load %arg7[%c0_36, %c0_37] : memref<1x32xf32, #tpu.memory_space<vmem>>, vector<1x32xf32>
    %115 = vector.broadcast %114 : vector<1x32xf32> to vector<8x32xf32>
    %116 = arith.addf %113, %115 : vector<8x32xf32>
    %cst_38 = arith.constant dense<0.000000e+00> : vector<8xf32>
    %117 = vector.multi_reduction <add>, %116, %cst_38 [1] : vector<8x32xf32> to vector<8xf32>
    %118 = vector.shape_cast %117 : vector<8xf32> to vector<8x1xf32>
    %cst_39 = arith.constant 3.200000e+01 : f32
    %119 = vector.broadcast %cst_39 : f32 to vector<8x1xf32>
    %120 = arith.divf %118, %119 : vector<8x1xf32>
    %121 = vector.broadcast %120 : vector<8x1xf32> to vector<8x32xf32>
    %122 = arith.subf %116, %121 : vector<8x32xf32>
    %123 = arith.mulf %122, %122 : vector<8x32xf32>
    %cst_40 = arith.constant dense<0.000000e+00> : vector<8xf32>
    %124 = vector.multi_reduction <add>, %123, %cst_40 [1] : vector<8x32xf32> to vector<8xf32>
    %125 = vector.shape_cast %124 : vector<8xf32> to vector<8x1xf32>
    %cst_41 = arith.constant 3.200000e+01 : f32
    %126 = vector.broadcast %cst_41 : f32 to vector<8x1xf32>
    %127 = arith.divf %125, %126 : vector<8x1xf32>
    %128 = vector.broadcast %120 : vector<8x1xf32> to vector<8x32xf32>
    %129 = arith.subf %116, %128 : vector<8x32xf32>
    %cst_42 = arith.constant 9.99999974E-6 : f32
    %130 = vector.broadcast %cst_42 : f32 to vector<8x1xf32>
    %131 = arith.addf %127, %130 : vector<8x1xf32>
    %132 = math.rsqrt %131 : vector<8x1xf32>
    %133 = vector.broadcast %132 : vector<8x1xf32> to vector<8x32xf32>
    %134 = arith.mulf %129, %133 : vector<8x32xf32>
    %c0_43 = arith.constant 0 : index
    %c0_44 = arith.constant 0 : index
    %135 = vector.load %arg8[%c0_43, %c0_44] : memref<1x32xf32, #tpu.memory_space<vmem>>, vector<1x32xf32>
    %136 = vector.broadcast %135 : vector<1x32xf32> to vector<8x32xf32>
    %137 = arith.mulf %134, %136 : vector<8x32xf32>
    %c0_45 = arith.constant 0 : index
    %c0_46 = arith.constant 0 : index
    %138 = vector.load %arg9[%c0_45, %c0_46] : memref<1x32xf32, #tpu.memory_space<vmem>>, vector<1x32xf32>
    %139 = vector.broadcast %138 : vector<1x32xf32> to vector<8x32xf32>
    %140 = arith.addf %137, %139 : vector<8x32xf32>
    %c0_47 = arith.constant 0 : index
    %c0_48 = arith.constant 0 : index
    %141 = vector.load %arg10[%c0_47, %c0_48] : memref<8x32xf32, #tpu.memory_space<vmem>>, vector<8x32xf32>
    tpu.vector_store %arg10[%c0_47, %c0_48], %140 {strides = array<i32>} : memref<8x32xf32, #tpu.memory_space<vmem>>, vector<8x32xf32>,
    return
  }
  func.func @transform_0(%arg0: i32) -> (i32, i32) {
    %c0_i32 = arith.constant 0 : i32
    %c0_i32_0 = arith.constant 0 : i32
    return %arg0, %c0_i32 : i32, i32
  }
  func.func @transform_1(%arg0: i32) -> (i32, i32) {
    %c0_i32 = arith.constant 0 : i32
    %c0_i32_0 = arith.constant 0 : i32
    %c0_i32_1 = arith.constant 0 : i32
    return %c0_i32, %c0_i32_0 : i32, i32
  }
  func.func @transform_2(%arg0: i32) -> (i32, i32) {
    %c0_i32 = arith.constant 0 : i32
    %c0_i32_0 = arith.constant 0 : i32
    %c0_i32_1 = arith.constant 0 : i32
    return %c0_i32, %c0_i32_0 : i32, i32
  }
  func.func @transform_3(%arg0: i32) -> (i32, i32) {
    %c0_i32 = arith.constant 0 : i32
    %c0_i32_0 = arith.constant 0 : i32
    %c0_i32_1 = arith.constant 0 : i32
    return %c0_i32, %c0_i32_0 : i32, i32
  }
  func.func @transform_4(%arg0: i32) -> (i32, i32) {
    %c0_i32 = arith.constant 0 : i32
    %c0_i32_0 = arith.constant 0 : i32
    %c0_i32_1 = arith.constant 0 : i32
    return %c0_i32, %c0_i32_0 : i32, i32
  }
  func.func @transform_5(%arg0: i32) -> (i32, i32) {
    %c0_i32 = arith.constant 0 : i32
    %c0_i32_0 = arith.constant 0 : i32
    %c0_i32_1 = arith.constant 0 : i32
    return %c0_i32, %c0_i32_0 : i32, i32
  }
  func.func @transform_6(%arg0: i32) -> (i32, i32) {
    %c0_i32 = arith.constant 0 : i32
    %c0_i32_0 = arith.constant 0 : i32
    %c0_i32_1 = arith.constant 0 : i32
    return %c0_i32, %c0_i32_0 : i32, i32
  }
  func.func @transform_7(%arg0: i32) -> (i32, i32) {
    %c0_i32 = arith.constant 0 : i32
    %c0_i32_0 = arith.constant 0 : i32
    %c0_i32_1 = arith.constant 0 : i32
    return %c0_i32, %c0_i32_0 : i32, i32
  }
  func.func @transform_8(%arg0: i32) -> (i32, i32) {
    %c0_i32 = arith.constant 0 : i32
    %c0_i32_0 = arith.constant 0 : i32
    %c0_i32_1 = arith.constant 0 : i32
    return %c0_i32, %c0_i32_0 : i32, i32
  }
  func.func @transform_9(%arg0: i32) -> (i32, i32) {
    %c0_i32 = arith.constant 0 : i32
    %c0_i32_0 = arith.constant 0 : i32
    return %arg0, %c0_i32 : i32, i32
  }
}

</mosaic_0001>

<llo_original>
// kernel: tpu_custom_call.1
$region0: #{tpu_custom_call.1}
  #allocation0 [shape = 'u32[]', space=smem, size = 0x4, offset = 0x4, fixed_abs, tag = 'smem constant byte address 0x4 - core index']
  #allocation1 [shape = 'u32[144,128]{1,0:T(1,128)}', space=vmem, size = 0x12000, scoped, tag = 'internal scratch']
  #allocation2 [shape = 'f32[8,32]{1,0:T(8,128)}', space=vmem, size = 0x1000, scoped, tag = 'scratch operand']
  %s0 = inlined_call_operand.hbm [shape: f32[16,16], index: 0, kind: input, shape index: {}]
  %s1 = inlined_call_operand.hbm [shape: bf16[16,32], index: 1, kind: input, shape index: {}]
  %s2 = inlined_call_operand.vmem [shape: f32[1,32], index: 2, kind: input, shape index: {}]
  %s3 = inlined_call_operand.hbm [shape: bf16[32,96], index: 3, kind: input, shape index: {}]
  %s4 = inlined_call_operand.vmem [shape: f32[1,96], index: 4, kind: input, shape index: {}]
  %s5 = inlined_call_operand.vmem [shape: bf16[32,32], index: 5, kind: input, shape index: {}]
  %s6 = inlined_call_operand.vmem [shape: f32[1,32], index: 6, kind: input, shape index: {}]
  %s7 = inlined_call_operand.vmem [shape: f32[1,32], index: 7, kind: input, shape index: {}]
  %s8 = inlined_call_operand.vmem [shape: f32[1,32], index: 8, kind: input, shape index: {}]
  %s9 = inlined_call_operand.hbm [shape: f32[16,32], index: 9, kind: output, shape index: {}]
  %s10 = sld [smem:[#allocation0]]
  $region81: #{tpu_custom_call.1} parent=0
    _
  %s12 = ssub.s32 1, %s10
  %s13 = scalar_select 0, %s12, %s10
  $region1: #{tpu_custom_call.1} parent=0
    #allocation3 [shape = 'u8[8192]{0}', space=vmem, size = 0x2000, scoped, tag = 'input window, operand 0']
    #allocation4 [shape = 's32[2]{0}', space=sflag, size = 0x8, scoped, tag = 'scoped memory for tpu_custom_call.1']
    #allocation5 [shape = 's32[2]{0}', space=sflag, size = 0x8, scoped, tag = 'scoped memory for tpu_custom_call.1']
    #allocation6 [shape = 'u8[4096]{0}', space=vmem, size = 0x1000, scoped, tag = 'input window, operand 1, single buffered']
    #allocation7 [shape = 's32[1]{0}', space=sflag, size = 0x4, scoped, tag = 'scoped memory for tpu_custom_call.1']
    #allocation8 [shape = 'u8[8192]{0}', space=vmem, size = 0x2000, scoped, tag = 'input window, operand 3, single buffered']
    #allocation9 [shape = 'u8[8192]{0}', space=vmem, size = 0x2000, scoped, tag = 'output window, operand 0']
    %14 = vsyncpa [#allocation4], 0
    %s15 = scalar_lea.sflag [#allocation4], 1
    %16 = vsyncpa %s15, 0
    %17 = vsyncpa [#allocation7], 0
    %18 = vsyncpa [#allocation5], 0
    %s19 = scalar_lea.sflag [#allocation5], 1
    %20 = vsyncpa %s19, 0
    loop: start=0, step=1, limit=4
    $region2: #{tpu_custom_call.1} parent=1 // loop_pre_header
      _
    $region3: #{tpu_custom_call.1} parent=1 // loop_header
      %s22 = sphi 0, %s26
      %p23 = scmp.ge.s32.totalorder %s22, 4
      %s32 = sphi 0, %s34
      %s35 = sphi 0, %s32
      %s36 = sphi 0, %s35
      %s52 = sphi 0, %s36
      %s56 = sphi 0, %s56
      %s58 = sphi 0, %s56
      %s59 = sphi 0, %s58
      %s73 = sphi 0, %s59
      %s77 = sphi 0, %s77
      %s79 = sphi 0, %s77
      %s80 = sphi 0, %s79
      %s94 = sphi 0, %s80
      %s98 = sphi 0, %s98
      %s100 = sphi 0, %s98
      %s101 = sphi 0, %s100
      %s115 = sphi 0, %s101
      %s119 = sphi 0, %s119
      %s121 = sphi 0, %s119
      %s122 = sphi 0, %s121
      %s136 = sphi 0, %s122
      %s140 = sphi 0, %s140
      %s142 = sphi 0, %s140
      %s143 = sphi 0, %s142
      %s157 = sphi 0, %s143
      %s161 = sphi 0, %s161
      %s163 = sphi 0, %s161
      %s164 = sphi 0, %s163
      %s178 = sphi 0, %s164
      %s182 = sphi 0, %s182
      %s184 = sphi 0, %s182
      %s185 = sphi 0, %s184
      %s199 = sphi 0, %s185
      %s203 = sphi 0, %s203
      %s205 = sphi 0, %s203
      %s206 = sphi 0, %s205
      %s220 = sphi 0, %s206
      %s226 = sphi 0, %s228
      %s229 = sphi 0, %s226
      %s230 = sphi 0, %s229
      %s246 = sphi 0, %s230
    $region4: #{tpu_custom_call.1} parent=1 // loop_header_branch
      %25 = sbr.rel (%p23) target = $region8
    $region5: #{tpu_custom_call.1} parent=1 // loop_body
      %s27 = ssub.s32 %s22, 1
      %s28 = ssub.s32 %s22, 2
      %s29 = sadd.s32 %s22, 1
      %s30 = ssub.s32 %s22, %s29
      %p31 = scmp.eq.s32.totalorder %s30, 0
      %s33 = sadd.s32 %s32, 1
      %s34 = scalar_select %p31, %s32, %s33
      %p37 = pneg %p31
      %p38 = scmp.eq.s32.totalorder %s22, 1
      %p39 = por %p37, %p38
      %p40 = scmp.ne.s32.totalorder %s32, %s35
      %p41 = scmp.eq.s32.totalorder %s22, 0
      %p42 = por %p40, %p41
      %p43 = scmp.ne.s32.totalorder %s32, %s35
      %p44 = scmp.eq.s32.totalorder %s27, 1
      %p45 = por %p43, %p44
      %p46 = scmp.ne.s32.totalorder %s35, %s36
      %p47 = scmp.eq.s32.totalorder %s27, 0
      %p48 = por %p46, %p47
      %p49 = scmp.ne.s32.totalorder %s35, %s36
      %p50 = scmp.eq.s32.totalorder %s28, 1
      %p51 = por %p49, %p50
      %p53 = scmp.ne.s32.totalorder %s36, %s52
      %p54 = scmp.eq.s32.totalorder %s28, 0
      %p55 = por %p53, %p54
      %s57 = sadd.s32 %s56, 1
      %p60 = scmp.eq.s32.totalorder %s22, 1
      %p61 = scmp.ne.s32.totalorder %s56, %s58
      %p62 = scmp.eq.s32.totalorder %s22, 0
      %p63 = por %p61, %p62
      %p64 = scmp.ne.s32.totalorder %s56, %s58
      %p65 = scmp.eq.s32.totalorder %s27, 1
      %p66 = por %p64, %p65
      %p67 = scmp.ne.s32.totalorder %s58, %s59
      %p68 = scmp.eq.s32.totalorder %s27, 0
      %p69 = por %p67, %p68
      %p70 = scmp.ne.s32.totalorder %s58, %s59
      %p71 = scmp.eq.s32.totalorder %s28, 1
      %p72 = por %p70, %p71
      %p74 = scmp.ne.s32.totalorder %s59, %s73
      %p75 = scmp.eq.s32.totalorder %s28, 0
      %p76 = por %p74, %p75
      %s78 = sadd.s32 %s77, 1
      %p81 = scmp.eq.s32.totalorder %s22, 1
      %p82 = scmp.ne.s32.totalorder %s77, %s79
      %p83 = scmp.eq.s32.totalorder %s22, 0
      %p84 = por %p82, %p83
      %p85 = scmp.ne.s32.totalorder %s77, %s79
      %p86 = scmp.eq.s32.totalorder %s27, 1
      %p87 = por %p85, %p86
      %p88 = scmp.ne.s32.totalorder %s79, %s80
      %p89 = scmp.eq.s32.totalorder %s27, 0
      %p90 = por %p88, %p89
      %p91 = scmp.ne.s32.totalorder %s79, %s80
      %p92 = scmp.eq.s32.totalorder %s28, 1
      %p93 = por %p91, %p92
      %p95 = scmp.ne.s32.totalorder %s80, %s94
      %p96 = scmp.eq.s32.totalorder %s28, 0
      %p97 = por %p95, %p96
      %s99 = sadd.s32 %s98, 1
      %p102 = scmp.eq.s32.totalorder %s22, 1
      %p103 = scmp.ne.s32.totalorder %s98, %s100
      %p104 = scmp.eq.s32.totalorder %s22, 0
      %p105 = por %p103, %p104
      %p106 = scmp.ne.s32.totalorder %s98, %s100
      %p107 = scmp.eq.s32.totalorder %s27, 1
      %p108 = por %p106, %p107
      %p109 = scmp.ne.s32.totalorder %s100, %s101
      %p110 = scmp.eq.s32.totalorder %s27, 0
      %p111 = por %p109, %p110
      %p112 = scmp.ne.s32.totalorder %s100, %s101
      %p113 = scmp.eq.s32.totalorder %s28, 1
      %p114 = por %p112, %p113
      %p116 = scmp.ne.s32.totalorder %s101, %s115
      %p117 = scmp.eq.s32.totalorder %s28, 0
      %p118 = por %p116, %p117
      %s120 = sadd.s32 %s119, 1
      %p123 = scmp.eq.s32.totalorder %s22, 1
      %p124 = scmp.ne.s32.totalorder %s119, %s121
      %p125 = scmp.eq.s32.totalorder %s22, 0
      %p126 = por %p124, %p125
      %p127 = scmp.ne.s32.totalorder %s119, %s121
      %p128 = scmp.eq.s32.totalorder %s27, 1
      %p129 = por %p127, %p128
      %p130 = scmp.ne.s32.totalorder %s121, %s122
      %p131 = scmp.eq.s32.totalorder %s27, 0
      %p132 = por %p130, %p131
      %p133 = scmp.ne.s32.totalorder %s121, %s122
      %p134 = scmp.eq.s32.totalorder %s28, 1
      %p135 = por %p133, %p134
      %p137 = scmp.ne.s32.totalorder %s122, %s136
      %p138 = scmp.eq.s32.totalorder %s28, 0
      %p139 = por %p137, %p138
      %s141 = sadd.s32 %s140, 1
      %p144 = scmp.eq.s32.totalorder %s22, 1
      %p145 = scmp.ne.s32.totalorder %s140, %s142
      %p146 = scmp.eq.s32.totalorder %s22, 0
      %p147 = por %p145, %p146
      %p148 = scmp.ne.s32.totalorder %s140, %s142
      %p149 = scmp.eq.s32.totalorder %s27, 1
      %p150 = por %p148, %p149
      %p151 = scmp.ne.s32.totalorder %s142, %s143
      %p152 = scmp.eq.s32.totalorder %s27, 0
      %p153 = por %p151, %p152
      %p154 = scmp.ne.s32.totalorder %s142, %s143
      %p155 = scmp.eq.s32.totalorder %s28, 1
      %p156 = por %p154, %p155
      %p158 = scmp.ne.s32.totalorder %s143, %s157
      %p159 = scmp.eq.s32.totalorder %s28, 0
      %p160 = por %p158, %p159
      %s162 = sadd.s32 %s161, 1
      %p165 = scmp.eq.s32.totalorder %s22, 1
      %p166 = scmp.ne.s32.totalorder %s161, %s163
      %p167 = scmp.eq.s32.totalorder %s22, 0
      %p168 = por %p166, %p167
      %p169 = scmp.ne.s32.totalorder %s161, %s163
      %p170 = scmp.eq.s32.totalorder %s27, 1
      %p171 = por %p169, %p170
      %p172 = scmp.ne.s32.totalorder %s163, %s164
      %p173 = scmp.eq.s32.totalorder %s27, 0
      %p174 = por %p172, %p173
      %p175 = scmp.ne.s32.totalorder %s163, %s164
      %p176 = scmp.eq.s32.totalorder %s28, 1
      %p177 = por %p175, %p176
      %p179 = scmp.ne.s32.totalorder %s164, %s178
      %p180 = scmp.eq.s32.totalorder %s28, 0
      %p181 = por %p179, %p180
      %s183 = sadd.s32 %s182, 1
      %p186 = scmp.eq.s32.totalorder %s22, 1
      %p187 = scmp.ne.s32.totalorder %s182, %s184
      %p188 = scmp.eq.s32.totalorder %s22, 0
      %p189 = por %p187, %p188
      %p190 = scmp.ne.s32.totalorder %s182, %s184
      %p191 = scmp.eq.s32.totalorder %s27, 1
      %p192 = por %p190, %p191
      %p193 = scmp.ne.s32.totalorder %s184, %s185
      %p194 = scmp.eq.s32.totalorder %s27, 0
      %p195 = por %p193, %p194
      %p196 = scmp.ne.s32.totalorder %s184, %s185
      %p197 = scmp.eq.s32.totalorder %s28, 1
      %p198 = por %p196, %p197
      %p200 = scmp.ne.s32.totalorder %s185, %s199
      %p201 = scmp.eq.s32.totalorder %s28, 0
      %p202 = por %p200, %p201
      %s204 = sadd.s32 %s203, 1
      %p207 = scmp.eq.s32.totalorder %s22, 1
      %p208 = scmp.ne.s32.totalorder %s203, %s205
      %p209 = scmp.eq.s32.totalorder %s22, 0
      %p210 = por %p208, %p209
      %p211 = scmp.ne.s32.totalorder %s203, %s205
      %p212 = scmp.eq.s32.totalorder %s27, 1
      %p213 = por %p211, %p212
      %p214 = scmp.ne.s32.totalorder %s205, %s206
      %p215 = scmp.eq.s32.totalorder %s27, 0
      %p216 = por %p214, %p215
      %p217 = scmp.ne.s32.totalorder %s205, %s206
      %p218 = scmp.eq.s32.totalorder %s28, 1
      %p219 = por %p217, %p218
      %p221 = scmp.ne.s32.totalorder %s206, %s220
      %p222 = scmp.eq.s32.totalorder %s28, 0
      %p223 = por %p221, %p222
      %s224 = ssub.s32 %s22, %s29
      %p225 = scmp.eq.s32.totalorder %s224, 0
      %s227 = sadd.s32 %s226, 1
      %s228 = scalar_select %p225, %s226, %s227
      %p231 = pneg %p225
      %p232 = scmp.eq.s32.totalorder %s22, 1
      %p233 = por %p231, %p232
      %p234 = scmp.ne.s32.totalorder %s226, %s229
      %p235 = scmp.eq.s32.totalorder %s22, 0
      %p236 = por %p234, %p235
      %p237 = scmp.ne.s32.totalorder %s226, %s229
      %p238 = scmp.eq.s32.totalorder %s27, 1
      %p239 = por %p237, %p238
      %p240 = scmp.ne.s32.totalorder %s229, %s230
      %p241 = scmp.eq.s32.totalorder %s27, 0
      %p242 = por %p240, %p241
      %p243 = scmp.ne.s32.totalorder %s229, %s230
      %p244 = scmp.eq.s32.totalorder %s28, 1
      %p245 = por %p243, %p244
      %p247 = scmp.ne.s32.totalorder %s230, %s246
      %p248 = scmp.eq.s32.totalorder %s28, 0
      %p249 = por %p247, %p248
      %p250 = scmp.le.s32.totalorder 1, %s22
      %p251 = scmp.lt.s32.totalorder %s22, 3
      %p252 = pnand %p250, %p251
      %p253 = pneg %p252
      // Predicated region
      $region9: #{tpu_custom_call.1} parent=5 // pred_check
        _
      $region10: #{tpu_custom_call.1} parent=5 // pred_check_branch
        %255 = sbr.rel (%p252) target = $region12
      $region11: #{tpu_custom_call.1} parent=5 // pred_region
        %s256 = ssub.s32 %s22, 1
        // Predicated region
        $region13: #{tpu_custom_call.1} parent=11 // pred_check
          %p257 = pneg %p69
        $region14: #{tpu_custom_call.1} parent=11 // pred_check_branch
          %259 = sbr.rel (%p257) target = $region16
        $region15: #{tpu_custom_call.1} parent=11 // pred_region
          %s261 = ssub.s32 128, 128
          %262 = vsyncadd [#allocation7], %s261
          %s263 = sshll.u32 [#allocation6], 4
          %s264 = int_to_ptr.vmem [resolvable:$true] %s263
          %269 = dma.hbm_to_vmem [thread:$0]  %s1, 128, %s264, [#allocation7], 64, 64, 4
        $region16: #{tpu_custom_call.1} parent=11 // pred_fallthru
          _
        // Predicated region
        $region17: #{tpu_custom_call.1} parent=11 // pred_check
          %p270 = pneg %p90
        $region18: #{tpu_custom_call.1} parent=11 // pred_check_branch
          %272 = sbr.rel (%p270) target = $region20
        $region19: #{tpu_custom_call.1} parent=11 // pred_region
          _
        $region20: #{tpu_custom_call.1} parent=11 // pred_fallthru
          _
        // Predicated region
        $region21: #{tpu_custom_call.1} parent=11 // pred_check
          %p273 = pneg %p111
        $region22: #{tpu_custom_call.1} parent=11 // pred_check_branch
          %275 = sbr.rel (%p273) target = $region24
        $region23: #{tpu_custom_call.1} parent=11 // pred_region
          %s277 = ssub.s32 256, 256
          %278 = vsyncadd [#allocation7], %s277
          %s279 = sshll.u32 [#allocation8], 4
          %s280 = int_to_ptr.vmem [resolvable:$true] %s279
          %285 = dma.hbm_to_vmem [thread:$0]  %s3, 256, %s280, [#allocation7], 64, 64, 4
        $region24: #{tpu_custom_call.1} parent=11 // pred_fallthru
          _
        // Predicated region
        $region25: #{tpu_custom_call.1} parent=11 // pred_check
          %p286 = pneg %p132
        $region26: #{tpu_custom_call.1} parent=11 // pred_check_branch
          %288 = sbr.rel (%p286) target = $region28
        $region27: #{tpu_custom_call.1} parent=11 // pred_region
          _
        $region28: #{tpu_custom_call.1} parent=11 // pred_fallthru
          _
        // Predicated region
        $region29: #{tpu_custom_call.1} parent=11 // pred_check
          %p289 = pneg %p153
        $region30: #{tpu_custom_call.1} parent=11 // pred_check_branch
          %291 = sbr.rel (%p289) target = $region32
        $region31: #{tpu_custom_call.1} parent=11 // pred_region
          _
        $region32: #{tpu_custom_call.1} parent=11 // pred_fallthru
          _
        // Predicated region
        $region33: #{tpu_custom_call.1} parent=11 // pred_check
          %p292 = pneg %p174
        $region34: #{tpu_custom_call.1} parent=11 // pred_check_branch
          %294 = sbr.rel (%p292) target = $region36
        $region35: #{tpu_custom_call.1} parent=11 // pred_region
          _
        $region36: #{tpu_custom_call.1} parent=11 // pred_fallthru
          _
        // Predicated region
        $region37: #{tpu_custom_call.1} parent=11 // pred_check
          %p295 = pneg %p195
        $region38: #{tpu_custom_call.1} parent=11 // pred_check_branch
          %297 = sbr.rel (%p295) target = $region40
        $region39: #{tpu_custom_call.1} parent=11 // pred_region
          _
        $region40: #{tpu_custom_call.1} parent=11 // pred_fallthru
          _
        // Predicated region
        $region41: #{tpu_custom_call.1} parent=11 // pred_check
          %p298 = pneg %p216
        $region42: #{tpu_custom_call.1} parent=11 // pred_check_branch
          %300 = sbr.rel (%p298) target = $region44
        $region43: #{tpu_custom_call.1} parent=11 // pred_region
          _
        $region44: #{tpu_custom_call.1} parent=11 // pred_fallthru
          _
      $region12: #{tpu_custom_call.1} parent=5 // pred_fallthru
        _
      %p301 = scmp.lt.s32.totalorder %s22, 2
      // Predicated region
      $region45: #{tpu_custom_call.1} parent=5 // pred_check
        %p302 = pneg %p301
      $region46: #{tpu_custom_call.1} parent=5 // pred_check_branch
        %304 = sbr.rel (%p302) target = $region48
      $region47: #{tpu_custom_call.1} parent=5 // pred_region
        // Predicated region
        $region49: #{tpu_custom_call.1} parent=47 // pred_check
          %p305 = pneg %p42
        $region50: #{tpu_custom_call.1} parent=47 // pred_check_branch
          %307 = sbr.rel (%p305) target = $region52
        $region51: #{tpu_custom_call.1} parent=47 // pred_region
          %s308 = sand.u32 %s32, 1
          %s309 = scalar_lea.sflag [#allocation4], %s308
          %s310 = sand.u32 %s32, 1
          %s311 = smul.addr %s310, 8
          %s312 = scalar_lea.vmem [#allocation3], %s311
          %s314 = ssub.s32 128, 128
          %315 = vsyncadd %s309, %s314
          %s316 = smul.addr %s22, 128
          %s317 = scalar_lea.hbm %s0, %s316
          %s319 = sshll.u32 %s312, 4
          %s320 = int_to_ptr.vmem [resolvable:$true] %s319
          %322 = dma.hbm_to_vmem [thread:$0]  %s317, 128, %s320, %s309
        $region52: #{tpu_custom_call.1} parent=47 // pred_fallthru
          _
      $region48: #{tpu_custom_call.1} parent=5 // pred_fallthru
        _
      %p323 = scmp.le.s32.totalorder 1, %s22
      %p324 = scmp.lt.s32.totalorder %s22, 3
      %p325 = pnand %p323, %p324
      %p326 = pneg %p325
      // Predicated region
      $region53: #{tpu_custom_call.1} parent=5 // pred_check
        _
      $region54: #{tpu_custom_call.1} parent=5 // pred_check_branch
        %328 = sbr.rel (%p325) target = $region56
      $region55: #{tpu_custom_call.1} parent=5 // pred_region
        %s329 = ssub.s32 %s22, 1
        %s330 = sand.u32 %s35, 1
        %s331 = scalar_lea.sflag [#allocation4], %s330
        %s332 = sand.u32 %s35, 1
        %s333 = smul.addr %s332, 8
        %s334 = scalar_lea.vmem [#allocation3], %s333
        // Predicated region
        $region57: #{tpu_custom_call.1} parent=55 // pred_check
          %p335 = pneg %p48
        $region58: #{tpu_custom_call.1} parent=55 // pred_check_branch
          %337 = sbr.rel (%p335) target = $region60
        $region59: #{tpu_custom_call.1} parent=55 // pred_region
          %338 = dma.done %s331, 128
        $region60: #{tpu_custom_call.1} parent=55 // pred_fallthru
          _
        // Predicated region
        $region61: #{tpu_custom_call.1} parent=55 // pred_check
          %p339 = pneg %p69
        $region62: #{tpu_custom_call.1} parent=55 // pred_check_branch
          %341 = sbr.rel (%p339) target = $region64
        $region63: #{tpu_custom_call.1} parent=55 // pred_region
          %342 = dma.done [#allocation7], 128
        $region64: #{tpu_custom_call.1} parent=55 // pred_fallthru
          _
        // Predicated region
        $region65: #{tpu_custom_call.1} parent=55 // pred_check
          %p343 = pneg %p111
        $region66: #{tpu_custom_call.1} parent=55 // pred_check_branch
          %345 = sbr.rel (%p343) target = $region68
        $region67: #{tpu_custom_call.1} parent=55 // pred_region
          %346 = dma.done [#allocation7], 256
        $region68: #{tpu_custom_call.1} parent=55 // pred_fallthru
          _
        %s347 = sand.u32 %s35, 1
        %s348 = scalar_lea.sflag [#allocation4], %s347
        %s349 = sand.u32 %s35, 1
        %s350 = smul.addr %s349, 8
        %s351 = scalar_lea.vmem [#allocation3], %s350
        %p352 = pneg %p48
        %p353 = pneg %p45
        %p354 = pneg %p69
        %p355 = pneg %p66
        %p356 = pneg %p90
        %p357 = pneg %p87
        %p358 = pneg %p111
        %p359 = pneg %p108
        %p360 = pneg %p132
        %p361 = pneg %p129
        %p362 = pneg %p153
        %p363 = pneg %p150
        %p364 = pneg %p174
        %p365 = pneg %p171
        %p366 = pneg %p195
        %p367 = pneg %p192
        %p368 = pneg %p216
        %p369 = pneg %p213
        %p370 = pneg %p242
        %p371 = pneg %p239
        %s372 = sand.u32 %s229, 1
        %s373 = scalar_lea.sflag [#allocation5], %s372
        %s374 = sand.u32 %s229, 1
        %s375 = smul.addr %s374, 8
        %s376 = scalar_lea.vmem [#allocation9], %s375
        %v378 = vld [vmem:[%s334] sm:$0xff]
        %v379 = vpack.c.bf16 %v378, %v378
        %v380 = vld [vmem:[#allocation6] sm:$0xf]
        %v381 = vld [vmem:[#allocation6 + $0x4] sm:$0xf]
        %v382 = vld [vmem:[%s2] sm:$0x1]
        %v384 = vlaneseq
        %v385 = vshrl.u32 %v384, 7
        %v386 = vsub.s32 0, %v385
        %v387 = vrot.slane %v382, %v386
        %v391 = vunpack.c.l.b16 %v380
        %v392 = vunpack.c.l.b16 %v381
        %v393 = vpack.c.b16 %v392, %v391
        %vm395 = vcmask 130048
        %v397 = vsel %vm395, %v379, 0
        %399 = vmatprep.subr.bf16.mxu0 0
        %400 = vmatpush1.bf16.msra.mxu0 %v393
        %401 = vmatprep.subr.bf16.mxu0 0
        %402 = vmatpush1.bf16.msra.mxu0 0
        %403 = vmatprep.subr.bf16.mxu0 0
        %404 = vmatpush1.bf16.msra.mxu0 0
        %405 = vmatprep.subr.bf16.mxu0 0
        %406 = vmatpush1.bf16.msra.mxu0 0
        %407 = vmatprep.subr.bf16.mxu0 0
        %408 = vmatpush1.bf16.msra.mxu0 0
        %409 = vmatprep.subr.bf16.mxu0 0
        %410 = vmatpush1.bf16.msra.mxu0 0
        %411 = vmatprep.subr.bf16.mxu0 0
        %412 = vmatpush1.bf16.msra.mxu0 0
        %413 = vmatprep.subr.bf16.mxu0 0
        %414 = vmatpush1.bf16.msra.mxu0 0
        %415 = vmatprep.subr.bf16.mxu0 0
        %416 = vmatpush1.bf16.msra.mxu0 0
        %417 = vmatprep.subr.bf16.mxu0 0
        %418 = vmatpush1.bf16.msra.mxu0 0
        %419 = vmatprep.subr.bf16.mxu0 0
        %420 = vmatpush1.bf16.msra.mxu0 0
        %421 = vmatprep.subr.bf16.mxu0 0
        %422 = vmatpush1.bf16.msra.mxu0 0
        %423 = vmatprep.subr.bf16.mxu0 0
        %424 = vmatpush1.bf16.msra.mxu0 0
        %425 = vmatprep.subr.bf16.mxu0 0
        %426 = vmatpush1.bf16.msra.mxu0 0
        %427 = vmatprep.subr.bf16.mxu0 0
        %428 = vmatpush1.bf16.msra.mxu0 0
        %429 = vmatprep.subr.bf16.mxu0 0
        %430 = vmatpush1.bf16.msra.mxu0 0
        %431 = vmatprep.mubr.bf16.mxu0 0
        %432 = vmatmul.mubr.bf16.gmra.mrb[0].mxu0 %v397
        %v433 = vpop.f32.mrb[0].mxu0
        %v434 = vadd.f32 %v387, %v433
        %v435 = vpop.f32.mrb[0].mxu0
        %v436 = vpop.f32.mrb[0].mxu0
        %v437 = vpop.f32.mrb[0].mxu0
        %438 = vdwg.mxu0
        %v439 = vpack.c.bf16 %v434, %v434
        %v440 = vld [vmem:[#allocation8] sm:$0xf]
        %v441 = vld [vmem:[#allocation8 + $0x4] sm:$0xf]
        %v442 = vld [vmem:[#allocation8 + $0x8] sm:$0xf]
        %v443 = vld [vmem:[#allocation8 + $0xc] sm:$0xf]
        %v444 = vld [vmem:[%s4] sm:$0x1]
        %v446 = vlaneseq
        %v447 = vshrl.u32 %v446, 7
        %v448 = vsub.s32 0, %v447
        %v449 = vrot.slane %v444, %v448
        %v455 = vunpack.c.l.b16 %v440
        %v456 = vunpack.c.l.b16 %v441
        %v457 = vunpack.c.l.b16 %v442
        %v458 = vunpack.c.l.b16 %v443
        %v459 = vpack.c.b16 %v456, %v455
        %v460 = vpack.c.b16 %v458, %v457
        %vm463 = vcmask 261120
        %v465 = vsel %vm463, %v439, 0
        %467 = vmatprep.subr.bf16.mxu0 0
        %468 = vmatpush1.bf16.msra.mxu0 %v459
        %469 = vmatprep.subr.bf16.mxu0 0
        %470 = vmatpush1.bf16.msra.mxu0 %v460
        %471 = vmatprep.subr.bf16.mxu0 0
        %472 = vmatpush1.bf16.msra.mxu0 0
        %473 = vmatprep.subr.bf16.mxu0 0
        %474 = vmatpush1.bf16.msra.mxu0 0
        %475 = vmatprep.subr.bf16.mxu0 0
        %476 = vmatpush1.bf16.msra.mxu0 0
        %477 = vmatprep.subr.bf16.mxu0 0
        %478 = vmatpush1.bf16.msra.mxu0 0
        %479 = vmatprep.subr.bf16.mxu0 0
        %480 = vmatpush1.bf16.msra.mxu0 0
        %481 = vmatprep.subr.bf16.mxu0 0
        %482 = vmatpush1.bf16.msra.mxu0 0
        %483 = vmatprep.subr.bf16.mxu0 0
        %484 = vmatpush1.bf16.msra.mxu0 0
        %485 = vmatprep.subr.bf16.mxu0 0
        %486 = vmatpush1.bf16.msra.mxu0 0
        %487 = vmatprep.subr.bf16.mxu0 0
        %488 = vmatpush1.bf16.msra.mxu0 0
        %489 = vmatprep.subr.bf16.mxu0 0
        %490 = vmatpush1.bf16.msra.mxu0 0
        %491 = vmatprep.subr.bf16.mxu0 0
        %492 = vmatpush1.bf16.msra.mxu0 0
        %493 = vmatprep.subr.bf16.mxu0 0
        %494 = vmatpush1.bf16.msra.mxu0 0
        %495 = vmatprep.subr.bf16.mxu0 0
        %496 = vmatpush1.bf16.msra.mxu0 0
        %497 = vmatprep.subr.bf16.mxu0 0
        %498 = vmatpush1.bf16.msra.mxu0 0
        %499 = vmatprep.mubr.bf16.mxu0 0
        %500 = vmatmul.mubr.bf16.gmra.mrb[0].mxu0 %v465
        %v501 = vpop.f32.mrb[0].mxu0
        %v502 = vadd.f32 %v449, %v501
        %v503 = vpop.f32.mrb[0].mxu0
        %v504 = vpop.f32.mrb[0].mxu0
        %v505 = vpop.f32.mrb[0].mxu0
        %506 = vdwg.mxu0
        %v507 = vpack.c.bf16 %v502, %v502
        %509 = vrot.lane.b32.xlu0 %v507, 96
        %v510 = vpop.permute.xlu0 %509
        %vm511 = vcmask 64512
        %v513 = vsel %vm511, %v507, 0
        %v516 = vsel %vm511, %v510, 0
        %518 = vmatprep.subr.bf16.mxu0 0
        %519 = vmatpush1.bf16.xpose.msra.mxu0 %v516
        %520 = vmatprep.subr.bf16.mxu0 0
        %521 = vmatpush1.bf16.xpose.msra.mxu0 0
        %522 = vmatprep.subr.bf16.mxu0 0
        %523 = vmatpush1.bf16.xpose.msra.mxu0 0
        %524 = vmatprep.subr.bf16.mxu0 0
        %525 = vmatpush1.bf16.xpose.msra.mxu0 0
        %526 = vmatprep.subr.bf16.mxu0 0
        %527 = vmatpush1.bf16.xpose.msra.mxu0 0
        %528 = vmatprep.subr.bf16.mxu0 0
        %529 = vmatpush1.bf16.xpose.msra.mxu0 0
        %530 = vmatprep.subr.bf16.mxu0 0
        %531 = vmatpush1.bf16.xpose.msra.mxu0 0
        %532 = vmatprep.subr.bf16.mxu0 0
        %533 = vmatpush1.bf16.xpose.msra.mxu0 0
        %534 = vmatprep.subr.bf16.mxu0 0
        %535 = vmatpush1.bf16.xpose.msra.mxu0 0
        %536 = vmatprep.subr.bf16.mxu0 0
        %537 = vmatpush1.bf16.xpose.msra.mxu0 0
        %538 = vmatprep.subr.bf16.mxu0 0
        %539 = vmatpush1.bf16.xpose.msra.mxu0 0
        %540 = vmatprep.subr.bf16.mxu0 0
        %541 = vmatpush1.bf16.xpose.msra.mxu0 0
        %542 = vmatprep.subr.bf16.mxu0 0
        %543 = vmatpush1.bf16.xpose.msra.mxu0 0
        %544 = vmatprep.subr.bf16.mxu0 0
        %545 = vmatpush1.bf16.xpose.msra.mxu0 0
        %546 = vmatprep.subr.bf16.mxu0 0
        %547 = vmatpush1.bf16.xpose.msra.mxu0 0
        %548 = vmatprep.subr.bf16.mxu0 0
        %549 = vmatpush1.bf16.xpose.msra.mxu0 0
        %550 = vmatprep.mubr.bf16.mxu0 0
        %551 = vmatmul.mubr.bf16.gmra.mrb[0].mxu0 %v513
        %v552 = vpop.f32.mrb[0].mxu0
        %v553 = vadd.f32 0.0, %v552
        %v554 = vpop.f32.mrb[0].mxu0
        %v555 = vpop.f32.mrb[0].mxu0
        %v556 = vpop.f32.mrb[0].mxu0
        %557 = vdwg.mxu0
        %v558 = vsel %vm511, %v553, -inf
        %559 = vmax.xlane.f32.xlu0 %v558
        %v560 = vpop.xlane.xlu0 %559
        %v561 = vsub.f32 %v553, %v560
        %v562 = vmul.f32 %v561, 1.442695
        %v563 = vpow.pop %v562
        %v564 = vsel %vm511, %v563, 0.0
        %565 = vadd.xlane.f32.xlu0 %v564
        %v566 = vpop.xlane.xlu0 %565
        %v567 = vrcp.pop %v566
        %v568 = vpack.c.bf16 %v563, %v563
        %569 = vrot.lane.b32.xlu0 %v507, 64
        %v570 = vpop.permute.xlu0 %569
        %v572 = vsel %vm511, %v568, 0
        %vm574 = vcmask 1043456
        %v576 = vsel %vm574, %v570, 0
        %578 = vmatprep.subr.bf16.mxu0 0
        %579 = vmatpush1.bf16.msra.mxu0 %v576
        %580 = vmatprep.subr.bf16.mxu0 0
        %581 = vmatpush1.bf16.msra.mxu0 0
        %582 = vmatprep.subr.bf16.mxu0 0
        %583 = vmatpush1.bf16.msra.mxu0 0
        %584 = vmatprep.subr.bf16.mxu0 0
        %585 = vmatpush1.bf16.msra.mxu0 0
        %586 = vmatprep.subr.bf16.mxu0 0
        %587 = vmatpush1.bf16.msra.mxu0 0
        %588 = vmatprep.subr.bf16.mxu0 0
        %589 = vmatpush1.bf16.msra.mxu0 0
        %590 = vmatprep.subr.bf16.mxu0 0
        %591 = vmatpush1.bf16.msra.mxu0 0
        %592 = vmatprep.subr.bf16.mxu0 0
        %593 = vmatpush1.bf16.msra.mxu0 0
        %594 = vmatprep.subr.bf16.mxu0 0
        %595 = vmatpush1.bf16.msra.mxu0 0
        %596 = vmatprep.subr.bf16.mxu0 0
        %597 = vmatpush1.bf16.msra.mxu0 0
        %598 = vmatprep.subr.bf16.mxu0 0
        %599 = vmatpush1.bf16.msra.mxu0 0
        %600 = vmatprep.subr.bf16.mxu0 0
        %601 = vmatpush1.bf16.msra.mxu0 0
        %602 = vmatprep.subr.bf16.mxu0 0
        %603 = vmatpush1.bf16.msra.mxu0 0
        %604 = vmatprep.subr.bf16.mxu0 0
        %605 = vmatpush1.bf16.msra.mxu0 0
        %606 = vmatprep.subr.bf16.mxu0 0
        %607 = vmatpush1.bf16.msra.mxu0 0
        %608 = vmatprep.subr.bf16.mxu0 0
        %609 = vmatpush1.bf16.msra.mxu0 0
        %610 = vmatprep.mubr.bf16.mxu0 0
        %611 = vmatmul.mubr.bf16.gmra.mrb[0].mxu0 %v572
        %v612 = vpop.f32.mrb[0].mxu0
        %v613 = vadd.f32 0.0, %v612
        %v614 = vpop.f32.mrb[0].mxu0
        %v615 = vpop.f32.mrb[0].mxu0
        %v616 = vpop.f32.mrb[0].mxu0
        %617 = vdwg.mxu0
        %v618 = vmul.f32 %v613, %v567
        %619 = vst.msk [vmem:[#allocation2] sm:$0xff] %vm511, %v618
        %620 = vrot.lane.b32.xlu0 %v507, 120
        %v621 = vpop.permute.xlu0 %620
        %622 = vrot.lane.b32.xlu0 %v507, 88
        %v623 = vpop.permute.xlu0 %622
        %v625 = vsel %vm511, %v621, 0
        %v628 = vsel %vm511, %v623, 0
        %630 = vmatprep.subr.bf16.mxu0 0
        %631 = vmatpush1.bf16.xpose.msra.mxu0 %v628
        %632 = vmatprep.subr.bf16.mxu0 0
        %633 = vmatpush1.bf16.xpose.msra.mxu0 0
        %634 = vmatprep.subr.bf16.mxu0 0
        %635 = vmatpush1.bf16.xpose.msra.mxu0 0
        %636 = vmatprep.subr.bf16.mxu0 0
        %637 = vmatpush1.bf16.xpose.msra.mxu0 0
        %638 = vmatprep.subr.bf16.mxu0 0
        %639 = vmatpush1.bf16.xpose.msra.mxu0 0
        %640 = vmatprep.subr.bf16.mxu0 0
        %641 = vmatpush1.bf16.xpose.msra.mxu0 0
        %642 = vmatprep.subr.bf16.mxu0 0
        %643 = vmatpush1.bf16.xpose.msra.mxu0 0
        %644 = vmatprep.subr.bf16.mxu0 0
        %645 = vmatpush1.bf16.xpose.msra.mxu0 0
        %646 = vmatprep.subr.bf16.mxu0 0
        %647 = vmatpush1.bf16.xpose.msra.mxu0 0
        %648 = vmatprep.subr.bf16.mxu0 0
        %649 = vmatpush1.bf16.xpose.msra.mxu0 0
        %650 = vmatprep.subr.bf16.mxu0 0
        %651 = vmatpush1.bf16.xpose.msra.mxu0 0
        %652 = vmatprep.subr.bf16.mxu0 0
        %653 = vmatpush1.bf16.xpose.msra.mxu0 0
        %654 = vmatprep.subr.bf16.mxu0 0
        %655 = vmatpush1.bf16.xpose.msra.mxu0 0
        %656 = vmatprep.subr.bf16.mxu0 0
        %657 = vmatpush1.bf16.xpose.msra.mxu0 0
        %658 = vmatprep.subr.bf16.mxu0 0
        %659 = vmatpush1.bf16.xpose.msra.mxu0 0
        %660 = vmatprep.subr.bf16.mxu0 0
        %661 = vmatpush1.bf16.xpose.msra.mxu0 0
        %662 = vmatprep.mubr.bf16.mxu0 0
        %663 = vmatmul.mubr.bf16.gmra.mrb[0].mxu0 %v625
        %v664 = vpop.f32.mrb[0].mxu0
        %v665 = vadd.f32 0.0, %v664
        %v666 = vpop.f32.mrb[0].mxu0
        %v667 = vpop.f32.mrb[0].mxu0
        %v668 = vpop.f32.mrb[0].mxu0
        %669 = vdwg.mxu0
        %v670 = vsel %vm511, %v665, -inf
        %671 = vmax.xlane.f32.xlu0 %v670
        %v672 = vpop.xlane.xlu0 %671
        %v673 = vsub.f32 %v665, %v672
        %v674 = vmul.f32 %v673, 1.442695
        %v675 = vpow.pop %v674
        %v676 = vsel %vm511, %v675, 0.0
        %677 = vadd.xlane.f32.xlu0 %v676
        %v678 = vpop.xlane.xlu0 %677
        %v679 = vrcp.pop %v678
        %v680 = vpack.c.bf16 %v675, %v675
        %681 = vrot.lane.b32.xlu0 %v507, 56
        %v682 = vpop.permute.xlu0 %681
        %v684 = vsel %vm511, %v680, 0
        %v687 = vsel %vm574, %v682, 0
        %689 = vmatprep.subr.bf16.mxu0 0
        %690 = vmatpush1.bf16.msra.mxu0 %v687
        %691 = vmatprep.subr.bf16.mxu0 0
        %692 = vmatpush1.bf16.msra.mxu0 0
        %693 = vmatprep.subr.bf16.mxu0 0
        %694 = vmatpush1.bf16.msra.mxu0 0
        %695 = vmatprep.subr.bf16.mxu0 0
        %696 = vmatpush1.bf16.msra.mxu0 0
        %697 = vmatprep.subr.bf16.mxu0 0
        %698 = vmatpush1.bf16.msra.mxu0 0
        %699 = vmatprep.subr.bf16.mxu0 0
        %700 = vmatpush1.bf16.msra.mxu0 0
        %701 = vmatprep.subr.bf16.mxu0 0
        %702 = vmatpush1.bf16.msra.mxu0 0
        %703 = vmatprep.subr.bf16.mxu0 0
        %704 = vmatpush1.bf16.msra.mxu0 0
        %705 = vmatprep.subr.bf16.mxu0 0
        %706 = vmatpush1.bf16.msra.mxu0 0
        %707 = vmatprep.subr.bf16.mxu0 0
        %708 = vmatpush1.bf16.msra.mxu0 0
        %709 = vmatprep.subr.bf16.mxu0 0
        %710 = vmatpush1.bf16.msra.mxu0 0
        %711 = vmatprep.subr.bf16.mxu0 0
        %712 = vmatpush1.bf16.msra.mxu0 0
        %713 = vmatprep.subr.bf16.mxu0 0
        %714 = vmatpush1.bf16.msra.mxu0 0
        %715 = vmatprep.subr.bf16.mxu0 0
        %716 = vmatpush1.bf16.msra.mxu0 0
        %717 = vmatprep.subr.bf16.mxu0 0
        %718 = vmatpush1.bf16.msra.mxu0 0
        %719 = vmatprep.subr.bf16.mxu0 0
        %720 = vmatpush1.bf16.msra.mxu0 0
        %721 = vmatprep.mubr.bf16.mxu0 0
        %722 = vmatmul.mubr.bf16.gmra.mrb[0].mxu0 %v684
        %v723 = vpop.f32.mrb[0].mxu0
        %v724 = vadd.f32 0.0, %v723
        %v725 = vpop.f32.mrb[0].mxu0
        %v726 = vpop.f32.mrb[0].mxu0
        %v727 = vpop.f32.mrb[0].mxu0
        %728 = vdwg.mxu0
        %v729 = vmul.f32 %v724, %v679
        %731 = vrot.lane.b32.xlu0 %v729, 8
        %v732 = vpop.permute.xlu0 %731
        %vm734 = vcmask 130112
        %735 = vst.msk [vmem:[#allocation2] sm:$0xff] %vm734, %v732
        %736 = vrot.lane.b32.xlu0 %v507, 112
        %v737 = vpop.permute.xlu0 %736
        %738 = vrot.lane.b32.xlu0 %v507, 80
        %v739 = vpop.permute.xlu0 %738
        %v741 = vsel %vm511, %v737, 0
        %v744 = vsel %vm511, %v739, 0
        %746 = vmatprep.subr.bf16.mxu0 0
        %747 = vmatpush1.bf16.xpose.msra.mxu0 %v744
        %748 = vmatprep.subr.bf16.mxu0 0
        %749 = vmatpush1.bf16.xpose.msra.mxu0 0
        %750 = vmatprep.subr.bf16.mxu0 0
        %751 = vmatpush1.bf16.xpose.msra.mxu0 0
        %752 = vmatprep.subr.bf16.mxu0 0
        %753 = vmatpush1.bf16.xpose.msra.mxu0 0
        %754 = vmatprep.subr.bf16.mxu0 0
        %755 = vmatpush1.bf16.xpose.msra.mxu0 0
        %756 = vmatprep.subr.bf16.mxu0 0
        %757 = vmatpush1.bf16.xpose.msra.mxu0 0
        %758 = vmatprep.subr.bf16.mxu0 0
        %759 = vmatpush1.bf16.xpose.msra.mxu0 0
        %760 = vmatprep.subr.bf16.mxu0 0
        %761 = vmatpush1.bf16.xpose.msra.mxu0 0
        %762 = vmatprep.subr.bf16.mxu0 0
        %763 = vmatpush1.bf16.xpose.msra.mxu0 0
        %764 = vmatprep.subr.bf16.mxu0 0
        %765 = vmatpush1.bf16.xpose.msra.mxu0 0
        %766 = vmatprep.subr.bf16.mxu0 0
        %767 = vmatpush1.bf16.xpose.msra.mxu0 0
        %768 = vmatprep.subr.bf16.mxu0 0
        %769 = vmatpush1.bf16.xpose.msra.mxu0 0
        %770 = vmatprep.subr.bf16.mxu0 0
        %771 = vmatpush1.bf16.xpose.msra.mxu0 0
        %772 = vmatprep.subr.bf16.mxu0 0
        %773 = vmatpush1.bf16.xpose.msra.mxu0 0
        %774 = vmatprep.subr.bf16.mxu0 0
        %775 = vmatpush1.bf16.xpose.msra.mxu0 0
        %776 = vmatprep.subr.bf16.mxu0 0
        %777 = vmatpush1.bf16.xpose.msra.mxu0 0
        %778 = vmatprep.mubr.bf16.mxu0 0
        %779 = vmatmul.mubr.bf16.gmra.mrb[0].mxu0 %v741
        %v780 = vpop.f32.mrb[0].mxu0
        %v781 = vadd.f32 0.0, %v780
        %v782 = vpop.f32.mrb[0].mxu0
        %v783 = vpop.f32.mrb[0].mxu0
        %v784 = vpop.f32.mrb[0].mxu0
        %785 = vdwg.mxu0
        %v786 = vsel %vm511, %v781, -inf
        %787 = vmax.xlane.f32.xlu0 %v786
        %v788 = vpop.xlane.xlu0 %787
        %v789 = vsub.f32 %v781, %v788
        %v790 = vmul.f32 %v789, 1.442695
        %v791 = vpow.pop %v790
        %v792 = vsel %vm511, %v791, 0.0
        %793 = vadd.xlane.f32.xlu0 %v792
        %v794 = vpop.xlane.xlu0 %793
        %v795 = vrcp.pop %v794
        %v796 = vpack.c.bf16 %v791, %v791
        %797 = vrot.lane.b32.xlu0 %v507, 48
        %v798 = vpop.permute.xlu0 %797
        %v800 = vsel %vm511, %v796, 0
        %v803 = vsel %vm574, %v798, 0
        %805 = vmatprep.subr.bf16.mxu0 0
        %806 = vmatpush1.bf16.msra.mxu0 %v803
        %807 = vmatprep.subr.bf16.mxu0 0
        %808 = vmatpush1.bf16.msra.mxu0 0
        %809 = vmatprep.subr.bf16.mxu0 0
        %810 = vmatpush1.bf16.msra.mxu0 0
        %811 = vmatprep.subr.bf16.mxu0 0
        %812 = vmatpush1.bf16.msra.mxu0 0
        %813 = vmatprep.subr.bf16.mxu0 0
        %814 = vmatpush1.bf16.msra.mxu0 0
        %815 = vmatprep.subr.bf16.mxu0 0
        %816 = vmatpush1.bf16.msra.mxu0 0
        %817 = vmatprep.subr.bf16.mxu0 0
        %818 = vmatpush1.bf16.msra.mxu0 0
        %819 = vmatprep.subr.bf16.mxu0 0
        %820 = vmatpush1.bf16.msra.mxu0 0
        %821 = vmatprep.subr.bf16.mxu0 0
        %822 = vmatpush1.bf16.msra.mxu0 0
        %823 = vmatprep.subr.bf16.mxu0 0
        %824 = vmatpush1.bf16.msra.mxu0 0
        %825 = vmatprep.subr.bf16.mxu0 0
        %826 = vmatpush1.bf16.msra.mxu0 0
        %827 = vmatprep.subr.bf16.mxu0 0
        %828 = vmatpush1.bf16.msra.mxu0 0
        %829 = vmatprep.subr.bf16.mxu0 0
        %830 = vmatpush1.bf16.msra.mxu0 0
        %831 = vmatprep.subr.bf16.mxu0 0
        %832 = vmatpush1.bf16.msra.mxu0 0
        %833 = vmatprep.subr.bf16.mxu0 0
        %834 = vmatpush1.bf16.msra.mxu0 0
        %835 = vmatprep.subr.bf16.mxu0 0
        %836 = vmatpush1.bf16.msra.mxu0 0
        %837 = vmatprep.mubr.bf16.mxu0 0
        %838 = vmatmul.mubr.bf16.gmra.mrb[0].mxu0 %v800
        %v839 = vpop.f32.mrb[0].mxu0
        %v840 = vadd.f32 0.0, %v839
        %v841 = vpop.f32.mrb[0].mxu0
        %v842 = vpop.f32.mrb[0].mxu0
        %v843 = vpop.f32.mrb[0].mxu0
        %844 = vdwg.mxu0
        %v845 = vmul.f32 %v840, %v795
        %847 = vrot.lane.b32.xlu0 %v845, 16
        %v848 = vpop.permute.xlu0 %847
        %vm850 = vcmask 195712
        %851 = vst.msk [vmem:[#allocation2] sm:$0xff] %vm850, %v848
        %852 = vrot.lane.b32.xlu0 %v507, 104
        %v853 = vpop.permute.xlu0 %852
        %854 = vrot.lane.b32.xlu0 %v507, 72
        %v855 = vpop.permute.xlu0 %854
        %v857 = vsel %vm511, %v853, 0
        %v860 = vsel %vm511, %v855, 0
        %862 = vmatprep.subr.bf16.mxu0 0
        %863 = vmatpush1.bf16.xpose.msra.mxu0 %v860
        %864 = vmatprep.subr.bf16.mxu0 0
        %865 = vmatpush1.bf16.xpose.msra.mxu0 0
        %866 = vmatprep.subr.bf16.mxu0 0
        %867 = vmatpush1.bf16.xpose.msra.mxu0 0
        %868 = vmatprep.subr.bf16.mxu0 0
        %869 = vmatpush1.bf16.xpose.msra.mxu0 0
        %870 = vmatprep.subr.bf16.mxu0 0
        %871 = vmatpush1.bf16.xpose.msra.mxu0 0
        %872 = vmatprep.subr.bf16.mxu0 0
        %873 = vmatpush1.bf16.xpose.msra.mxu0 0
        %874 = vmatprep.subr.bf16.mxu0 0
        %875 = vmatpush1.bf16.xpose.msra.mxu0 0
        %876 = vmatprep.subr.bf16.mxu0 0
        %877 = vmatpush1.bf16.xpose.msra.mxu0 0
        %878 = vmatprep.subr.bf16.mxu0 0
        %879 = vmatpush1.bf16.xpose.msra.mxu0 0
        %880 = vmatprep.subr.bf16.mxu0 0
        %881 = vmatpush1.bf16.xpose.msra.mxu0 0
        %882 = vmatprep.subr.bf16.mxu0 0
        %883 = vmatpush1.bf16.xpose.msra.mxu0 0
        %884 = vmatprep.subr.bf16.mxu0 0
        %885 = vmatpush1.bf16.xpose.msra.mxu0 0
        %886 = vmatprep.subr.bf16.mxu0 0
        %887 = vmatpush1.bf16.xpose.msra.mxu0 0
        %888 = vmatprep.subr.bf16.mxu0 0
        %889 = vmatpush1.bf16.xpose.msra.mxu0 0
        %890 = vmatprep.subr.bf16.mxu0 0
        %891 = vmatpush1.bf16.xpose.msra.mxu0 0
        %892 = vmatprep.subr.bf16.mxu0 0
        %893 = vmatpush1.bf16.xpose.msra.mxu0 0
        %894 = vmatprep.mubr.bf16.mxu0 0
        %895 = vmatmul.mubr.bf16.gmra.mrb[0].mxu0 %v857
        %v896 = vpop.f32.mrb[0].mxu0
        %v897 = vadd.f32 0.0, %v896
        %v898 = vpop.f32.mrb[0].mxu0
        %v899 = vpop.f32.mrb[0].mxu0
        %v900 = vpop.f32.mrb[0].mxu0
        %901 = vdwg.mxu0
        %v902 = vsel %vm511, %v897, -inf
        %903 = vmax.xlane.f32.xlu0 %v902
        %v904 = vpop.xlane.xlu0 %903
        %v905 = vsub.f32 %v897, %v904
        %v906 = vmul.f32 %v905, 1.442695
        %v907 = vpow.pop %v906
        %v908 = vsel %vm511, %v907, 0.0
        %909 = vadd.xlane.f32.xlu0 %v908
        %v910 = vpop.xlane.xlu0 %909
        %v911 = vrcp.pop %v910
        %v912 = vpack.c.bf16 %v907, %v907
        %913 = vrot.lane.b32.xlu0 %v507, 40
        %v914 = vpop.permute.xlu0 %913
        %v916 = vsel %vm511, %v912, 0
        %v919 = vsel %vm574, %v914, 0
        %921 = vmatprep.subr.bf16.mxu0 0
        %922 = vmatpush1.bf16.msra.mxu0 %v919
        %923 = vmatprep.subr.bf16.mxu0 0
        %924 = vmatpush1.bf16.msra.mxu0 0
        %925 = vmatprep.subr.bf16.mxu0 0
        %926 = vmatpush1.bf16.msra.mxu0 0
        %927 = vmatprep.subr.bf16.mxu0 0
        %928 = vmatpush1.bf16.msra.mxu0 0
        %929 = vmatprep.subr.bf16.mxu0 0
        %930 = vmatpush1.bf16.msra.mxu0 0
        %931 = vmatprep.subr.bf16.mxu0 0
        %932 = vmatpush1.bf16.msra.mxu0 0
        %933 = vmatprep.subr.bf16.mxu0 0
        %934 = vmatpush1.bf16.msra.mxu0 0
        %935 = vmatprep.subr.bf16.mxu0 0
        %936 = vmatpush1.bf16.msra.mxu0 0
        %937 = vmatprep.subr.bf16.mxu0 0
        %938 = vmatpush1.bf16.msra.mxu0 0
        %939 = vmatprep.subr.bf16.mxu0 0
        %940 = vmatpush1.bf16.msra.mxu0 0
        %941 = vmatprep.subr.bf16.mxu0 0
        %942 = vmatpush1.bf16.msra.mxu0 0
        %943 = vmatprep.subr.bf16.mxu0 0
        %944 = vmatpush1.bf16.msra.mxu0 0
        %945 = vmatprep.subr.bf16.mxu0 0
        %946 = vmatpush1.bf16.msra.mxu0 0
        %947 = vmatprep.subr.bf16.mxu0 0
        %948 = vmatpush1.bf16.msra.mxu0 0
        %949 = vmatprep.subr.bf16.mxu0 0
        %950 = vmatpush1.bf16.msra.mxu0 0
        %951 = vmatprep.subr.bf16.mxu0 0
        %952 = vmatpush1.bf16.msra.mxu0 0
        %953 = vmatprep.mubr.bf16.mxu0 0
        %954 = vmatmul.mubr.bf16.gmra.mrb[0].mxu0 %v916
        %v955 = vpop.f32.mrb[0].mxu0
        %v956 = vadd.f32 0.0, %v955
        %v957 = vpop.f32.mrb[0].mxu0
        %v958 = vpop.f32.mrb[0].mxu0
        %v959 = vpop.f32.mrb[0].mxu0
        %960 = vdwg.mxu0
        %v961 = vmul.f32 %v956, %v911
        %963 = vrot.lane.b32.xlu0 %v961, 24
        %v964 = vpop.permute.xlu0 %963
        %vm966 = vcmask 261312
        %967 = vst.msk [vmem:[#allocation2] sm:$0xff] %vm966, %v964
        %v968 = vld [vmem:[#allocation2] sm:$0xff]
        %v969 = vpack.c.bf16 %v968, %v968
        %v970 = vld [vmem:[%s5] sm:$0xf]
        %v971 = vld [vmem:[%s5 + $0x4] sm:$0xf]
        %v972 = vld [vmem:[%s5 + $0x8] sm:$0xf]
        %v973 = vld [vmem:[%s5 + $0xc] sm:$0xf]
        %v978 = vunpack.c.l.b16 %v970
        %v979 = vunpack.c.l.b16 %v971
        %v980 = vunpack.c.l.b16 %v972
        %v981 = vunpack.c.l.b16 %v973
        %v982 = vpack.c.b16 %v979, %v978
        %v983 = vpack.c.b16 %v981, %v980
        %v987 = vsel %vm463, %v969, 0
        %989 = vmatprep.subr.bf16.mxu0 0
        %990 = vmatpush1.bf16.msra.mxu0 %v982
        %991 = vmatprep.subr.bf16.mxu0 0
        %992 = vmatpush1.bf16.msra.mxu0 %v983
        %993 = vmatprep.subr.bf16.mxu0 0
        %994 = vmatpush1.bf16.msra.mxu0 0
        %995 = vmatprep.subr.bf16.mxu0 0
        %996 = vmatpush1.bf16.msra.mxu0 0
        %997 = vmatprep.subr.bf16.mxu0 0
        %998 = vmatpush1.bf16.msra.mxu0 0
        %999 = vmatprep.subr.bf16.mxu0 0
        %1000 = vmatpush1.bf16.msra.mxu0 0
        %1001 = vmatprep.subr.bf16.mxu0 0
        %1002 = vmatpush1.bf16.msra.mxu0 0
        %1003 = vmatprep.subr.bf16.mxu0 0
        %1004 = vmatpush1.bf16.msra.mxu0 0
        %1005 = vmatprep.subr.bf16.mxu0 0
        %1006 = vmatpush1.bf16.msra.mxu0 0
        %1007 = vmatprep.subr.bf16.mxu0 0
        %1008 = vmatpush1.bf16.msra.mxu0 0
        %1009 = vmatprep.subr.bf16.mxu0 0
        %1010 = vmatpush1.bf16.msra.mxu0 0
        %1011 = vmatprep.subr.bf16.mxu0 0
        %1012 = vmatpush1.bf16.msra.mxu0 0
        %1013 = vmatprep.subr.bf16.mxu0 0
        %1014 = vmatpush1.bf16.msra.mxu0 0
        %1015 = vmatprep.subr.bf16.mxu0 0
        %1016 = vmatpush1.bf16.msra.mxu0 0
        %1017 = vmatprep.subr.bf16.mxu0 0
        %1018 = vmatpush1.bf16.msra.mxu0 0
        %1019 = vmatprep.subr.bf16.mxu0 0
        %1020 = vmatpush1.bf16.msra.mxu0 0
        %1021 = vmatprep.mubr.bf16.mxu0 0
        %1022 = vmatmul.mubr.bf16.gmra.mrb[0].mxu0 %v987
        %v1023 = vpop.f32.mrb[0].mxu0
        %v1024 = vadd.f32 0.0, %v1023
        %v1025 = vpop.f32.mrb[0].mxu0
        %v1026 = vpop.f32.mrb[0].mxu0
        %v1027 = vpop.f32.mrb[0].mxu0
        %1028 = vdwg.mxu0
        %v1029 = vadd.f32 %v434, %v1024
        %v1030 = vld [vmem:[%s6] sm:$0x1]
        %v1032 = vlaneseq
        %v1033 = vshrl.u32 %v1032, 7
        %v1034 = vsub.s32 0, %v1033
        %v1035 = vrot.slane %v1030, %v1034
        %v1037 = vadd.f32 %v1029, %v1035
        %v1038 = vsel %vm463, %v1037, 0.0
        %1039 = vadd.xlane.f32.xlu0 %v1038
        %v1040 = vpop.xlane.xlu0 %1039
        %v1041 = vrcp.pop 32.0
        %v1042 = vmul.f32 %v1040, %v1041
        %v1043 = vsub.f32 %v1037, %v1042
        %v1044 = vmul.f32 %v1043, %v1043
        %v1045 = vsel %vm463, %v1044, 0.0
        %1046 = vadd.xlane.f32.xlu0 %v1045
        %v1047 = vpop.xlane.xlu0 %1046
        %v1048 = vmul.f32 %v1047, %v1041
        %v1049 = vadd.f32 %v1048, 1e-05
        %v1050 = vrsqrt.pop %v1049
        %v1051 = vmul.f32 %v1043, %v1050
        %v1052 = vld [vmem:[%s7] sm:$0x1]
        %v1054 = vlaneseq
        %v1055 = vshrl.u32 %v1054, 7
        %v1056 = vsub.s32 0, %v1055
        %v1057 = vrot.slane %v1052, %v1056
        %v1059 = vmul.f32 %v1051, %v1057
        %v1060 = vld [vmem:[%s8] sm:$0x1]
        %v1062 = vlaneseq
        %v1063 = vshrl.u32 %v1062, 7
        %v1064 = vsub.s32 0, %v1063
        %v1065 = vrot.slane %v1060, %v1064
        %v1067 = vadd.f32 %v1059, %v1065
        %1068 = vst.msk [vmem:[%s376] sm:$0xff] %vm463, %v1067
        %s1069 = sand.u32 %s229, 1
        %s1070 = scalar_lea.sflag [#allocation5], %s1069
        %s1071 = sand.u32 %s229, 1
        %s1072 = smul.addr %s1071, 8
        %s1073 = scalar_lea.vmem [#allocation9], %s1072
        // Predicated region
        $region69: #{tpu_custom_call.1} parent=55 // pred_check
          %p1074 = pneg %p239
        $region70: #{tpu_custom_call.1} parent=55 // pred_check_branch
          %1076 = sbr.rel (%p1074) target = $region72
        $region71: #{tpu_custom_call.1} parent=55 // pred_region
          %s1078 = ssub.s32 128, 128
          %1079 = vsyncadd %s1070, %s1078
          %s1080 = smul.addr %s27, 128
          %s1081 = scalar_lea.hbm %s9, %s1080
          %s1083 = sshll.u32 %s1073, 4
          %s1084 = int_to_ptr.vmem [resolvable:$true] %s1083
          %1086 = dma.vmem_to_hbm [thread:$0]  %s1084, 128, %s1081, %s1070
        $region72: #{tpu_custom_call.1} parent=55 // pred_fallthru
          _
      $region56: #{tpu_custom_call.1} parent=5 // pred_fallthru
        _
      %p1087 = scmp.le.s32.totalorder 2, %s22
      // Predicated region
      $region73: #{tpu_custom_call.1} parent=5 // pred_check
        %p1088 = pneg %p1087
      $region74: #{tpu_custom_call.1} parent=5 // pred_check_branch
        %1090 = sbr.rel (%p1088) target = $region76
      $region75: #{tpu_custom_call.1} parent=5 // pred_region
        %s1091 = ssub.s32 %s22, 2
        // Predicated region
        $region77: #{tpu_custom_call.1} parent=75 // pred_check
          %p1092 = pneg %p245
        $region78: #{tpu_custom_call.1} parent=75 // pred_check_branch
          %1094 = sbr.rel (%p1092) target = $region80
        $region79: #{tpu_custom_call.1} parent=75 // pred_region
          %s1095 = sand.u32 %s230, 1
          %s1096 = scalar_lea.sflag [#allocation5], %s1095
          %s1097 = sand.u32 %s230, 1
          %s1098 = smul.addr %s1097, 8
          %s1099 = scalar_lea.vmem [#allocation9], %s1098
          %1100 = dma.done %s1096, 128
        $region80: #{tpu_custom_call.1} parent=75 // pred_fallthru
          _
      $region76: #{tpu_custom_call.1} parent=5 // pred_fallthru
        _
    $region6: #{tpu_custom_call.1} parent=1 // loop_footer
      %s26 = sadd.s32 1, %s22
    $region7: #{tpu_custom_call.1} parent=1 // loop_footer_branch
      %21 = sbr.rel target = $region3
    $region8: #{tpu_custom_call.1} parent=1 // loop_exit
      _
    %1101 = vsyncpa [#allocation4], 1
    %s1102 = scalar_lea.sflag [#allocation4], 1
    %1103 = vsyncpa %s1102, 1
    %1104 = vsyncpa [#allocation7], 1
    %1105 = vsyncpa [#allocation5], 1
    %s1106 = scalar_lea.sflag [#allocation5], 1
    %1107 = vsyncpa %s1106, 1

</llo_original>
